<compile_context>
chip_gen: v7x
topology: tpu7x:2x2x1
jax: 0.10.0
libtpu: 0.0.40
codegen_flags: <defaults>
</compile_context>

<pallas_src>
import jax
import jax.numpy as jnp
from jax import lax
from jax.experimental import pallas as pl
from jax.experimental.pallas import tpu as pltpu

BS = 3                  # spatial block size (block_size=(3,3))
P = BS * BS             # 9 positions per block
EPS = 1e-5
LANE = 128
ACT_DTYPE = jnp.bfloat16        # intra-unit pre-activation streams (y1p / y2p)
OP_DTYPE = jnp.bfloat16         # conv operator matrices (MXU-native)
ACT_BYTES = jnp.dtype(ACT_DTYPE).itemsize
OP_BYTES = jnp.dtype(OP_DTYPE).itemsize
TARGET_TILE_BYTES = 4 * 1024 * 1024     # per big-stream tile (size tiles by bytes)


def _round_up(v, m):
    return ((v + m - 1) // m) * m


def _cdiv(a, b):
    return (a + b - 1) // b


def _vmem_capacity():
    try:
        return int(pltpu.get_tpu_info().vmem_capacity_bytes)
    except Exception:
        return 64 * 1024 * 1024         # conservative: v7x per-core VMEM


# ------------------------------ Pallas kernels -------------------------------
def _row_act(scal_ref, tkb):
    """Per-row active flag in the COMPACTED layout: global row index < count."""
    rows = pl.program_id(0) * tkb + lax.broadcasted_iota(jnp.int32, (tkb, 1), 0)
    return (rows < scal_ref[1]).astype(jnp.float32)


def _conv_stats_kernel(scal_ref, x_ref, m_ref, b_ref, yp_ref, sq_ref):
    """conv (block-local matmul) + bias-shifted, active-only BN partial sums."""
    tkb = x_ref.shape[0]
    cp = yp_ref.shape[1]
    yp = jnp.dot(x_ref[...].astype(OP_DTYPE), m_ref[...],
                 preferred_element_type=jnp.float32) + b_ref[...]
    yp_ref[...] = yp.astype(yp_ref.dtype)
    act = _row_act(scal_ref, tkb)
    yc = yp - b_ref[...]            # shift by bias: less cancellation in E[y^2]-E[y]^2
    ay = act * yc                   # inactive / padded / stale-tile rows contribute 0
    sq_ref[:, :cp] = jnp.broadcast_to(jnp.sum(ay, axis=0, keepdims=True), (8, cp))
    sq_ref[:, cp:] = jnp.broadcast_to(jnp.sum(ay * yc, axis=0, keepdims=True), (8, cp))


def _bnrelu_conv_stats_kernel(scal_ref, yp_in_ref, sc_ref, sh_ref, m_ref, b_ref,
                              yp_out_ref, sq_ref):
    """relu(bn(prev pre-act)) -> conv (block-local matmul) + BN partial sums."""
    tkb = yp_in_ref.shape[0]
    cp = yp_out_ref.shape[1]
    y = jnp.maximum(yp_in_ref[...] * sc_ref[...] + sh_ref[...], 0.0)
    yp = jnp.dot(y.astype(OP_DTYPE), m_ref[...],
                 preferred_element_type=jnp.float32) + b_ref[...]
    yp_out_ref[...] = yp.astype(yp_out_ref.dtype)
    act = _row_act(scal_ref, tkb)
    yc = yp - b_ref[...]
    ay = act * yc
    sq_ref[:, :cp] = jnp.broadcast_to(jnp.sum(ay, axis=0, keepdims=True), (8, cp))
    sq_ref[:, cp:] = jnp.broadcast_to(jnp.sum(ay * yc, axis=0, keepdims=True), (8, cp))


def _bnrelu_scatter_kernel(scal_ref, yp_ref, sc_ref, sh_ref, x_ref, y_ref):
    """cin == cout: ybase = x; scatter-add processed blocks where active."""
    tkb = yp_ref.shape[0]
    act = _row_act(scal_ref, tkb)
    y2 = jnp.maximum(yp_ref[...] * sc_ref[...] + sh_ref[...], 0.0)
    y_ref[...] = (x_ref[...] + act * y2).astype(y_ref.dtype)


def _bnrelu_ds_scatter_kernel(scal_ref, yp_ref, sc_ref, sh_ref, x_ref, md_ref,
                              bd_ref, y_ref):
    """cin != cout: ybase = 1x1 downsample(x); scatter-add where active."""
    tkb = yp_ref.shape[0]
    act = _row_act(scal_ref, tkb)
    y2 = jnp.maximum(yp_ref[...] * sc_ref[...] + sh_ref[...], 0.0)
    ybase = (jnp.dot(x_ref[...].astype(OP_DTYPE), md_ref[...],
                     preferred_element_type=jnp.float32) + bd_ref[...])
    y_ref[...] = (ybase + act * y2).astype(y_ref.dtype)


# ----------------------------- pallas_call glue -------------------------------
def _full_row_spec(tkb, cp):
    return pl.BlockSpec((tkb, cp), lambda i, s: (i, 0))


def _active_row_spec(tkb, cp):
    # Active-only: steps past the last active tile clamp to it, so the pipeline
    # neither re-fetches nor re-writes that block -> traffic scales with count.
    return pl.BlockSpec((tkb, cp), lambda i, s: (jnp.minimum(i, s[0] - 1), 0))


def _resident_spec(shape):
    return pl.BlockSpec(shape, lambda i, s: (0, 0))


def _stats_spec(cpout):
    return pl.BlockSpec((8, 2 * cpout), lambda i, s: (i, 0))


def _compiler_params(step_bytes, resident_bytes):
    # Every per-step stream is double-buffered; the constant-index resident
    # operator/bias rows are (conservatively) counted double-buffered too.
    need = 2 * int(step_bytes) + 2 * int(resident_bytes) + (4 << 20)
    cap = _vmem_capacity()
    limit = int(max(16 << 20, min(int(cap * 0.85), need)))
    return pltpu.CompilerParams(dimension_semantics=("parallel",),
                                vmem_limit_bytes=limit)


def _conv_stats(scal, xb, mop, brow, tkb):
    kbpad, cpin = xb.shape
    cpout = mop.shape[1]
    g = kbpad // tkb
    step_bytes = tkb * cpin * 4 + tkb * cpout * ACT_BYTES + 8 * 2 * cpout * 4
    resident_bytes = cpin * cpout * OP_BYTES + cpout * 4
    return pl.pallas_call(
        _conv_stats_kernel,
        grid_spec=pltpu.PrefetchScalarGridSpec(
            num_scalar_prefetch=1, grid=(g,),
            in_specs=[_active_row_spec(tkb, cpin),
                      _resident_spec((cpin, cpout)), _resident_spec((1, cpout))],
            out_specs=(_active_row_spec(tkb, cpout), _stats_spec(cpout))),
        out_shape=(jax.ShapeDtypeStruct((kbpad, cpout), ACT_DTYPE),
                   jax.ShapeDtypeStruct((g * 8, 2 * cpout), jnp.float32)),
        compiler_params=_compiler_params(step_bytes, resident_bytes),
        cost_estimate=pl.CostEstimate(
            flops=2 * kbpad * cpin * cpout, transcendentals=0,
            bytes_accessed=int(g * step_bytes + resident_bytes)),
    )(scal, xb, mop, brow)


def _bnrelu_conv_stats(scal, ypin, sc, sh, mop, brow, tkb):
    kbpad, cpin = ypin.shape
    cpout = mop.shape[1]
    g = kbpad // tkb
    step_bytes = tkb * cpin * ACT_BYTES + tkb * cpout * ACT_BYTES + 8 * 2 * cpout * 4
    resident_bytes = cpin * cpout * OP_BYTES + 3 * cpout * 4
    return pl.pallas_call(
        _bnrelu_conv_stats_kernel,
        grid_spec=pltpu.PrefetchScalarGridSpec(
            num_scalar_prefetch=1, grid=(g,),
            in_specs=[_active_row_spec(tkb, cpin),
                      _resident_spec((1, cpin)), _resident_spec((1, cpin)),
                      _resident_spec((cpin, cpout)), _resident_spec((1, cpout))],
            out_specs=(_active_row_spec(tkb, cpout), _stats_spec(cpout))),
        out_shape=(jax.ShapeDtypeStruct((kbpad, cpout), ACT_DTYPE),
                   jax.ShapeDtypeStruct((g * 8, 2 * cpout), jnp.float32)),
        compiler_params=_compiler_params(step_bytes, resident_bytes),
        cost_estimate=pl.CostEstimate(
            flops=2 * kbpad * cpin * cpout + 4 * kbpad * cpin, transcendentals=0,
            bytes_accessed=int(g * step_bytes + resident_bytes)),
    )(scal, ypin, sc, sh, mop, brow)


def _bnrelu_scatter(scal, yp, sc, sh, xb, tkb):
    kbpad, cpout = yp.shape
    g = kbpad // tkb
    step_bytes = tkb * cpout * (ACT_BYTES + 4 + 4)
    resident_bytes = 2 * cpout * 4
    return pl.pallas_call(
        _bnrelu_scatter_kernel,
        grid_spec=pltpu.PrefetchScalarGridSpec(
            num_scalar_prefetch=1, grid=(g,),
            in_specs=[_active_row_spec(tkb, cpout),
                      _resident_spec((1, cpout)), _resident_spec((1, cpout)),
                      _full_row_spec(tkb, cpout)],
            out_specs=_full_row_spec(tkb, cpout)),
        out_shape=jax.ShapeDtypeStruct((kbpad, cpout), jnp.float32),
        compiler_params=_compiler_params(step_bytes, resident_bytes),
        cost_estimate=pl.CostEstimate(
            flops=5 * kbpad * cpout, transcendentals=0,
            bytes_accessed=int(g * step_bytes)),
    )(scal, yp, sc, sh, xb)


def _bnrelu_ds_scatter(scal, yp, sc, sh, xb, mdt, bd, tkb):
    kbpad, cpout = yp.shape
    cpin = xb.shape[1]
    g = kbpad // tkb
    step_bytes = tkb * cpout * (ACT_BYTES + 4) + tkb * cpin * 4
    resident_bytes = cpin * cpout * OP_BYTES + 3 * cpout * 4
    return pl.pallas_call(
        _bnrelu_ds_scatter_kernel,
        grid_spec=pltpu.PrefetchScalarGridSpec(
            num_scalar_prefetch=1, grid=(g,),
            in_specs=[_active_row_spec(tkb, cpout),
                      _resident_spec((1, cpout)), _resident_spec((1, cpout)),
                      _full_row_spec(tkb, cpin),
                      _resident_spec((cpin, cpout)), _resident_spec((1, cpout))],
            out_specs=_full_row_spec(tkb, cpout)),
        out_shape=jax.ShapeDtypeStruct((kbpad, cpout), jnp.float32),
        compiler_params=_compiler_params(step_bytes, resident_bytes),
        cost_estimate=pl.CostEstimate(
            flops=2 * kbpad * cpin * cpout, transcendentals=0,
            bytes_accessed=int(g * step_bytes + resident_bytes)),
    )(scal, yp, sc, sh, xb, mdt, bd)


# ------------------------- operators / BN fold / layout -----------------------
def _conv1x1_operator(w, cin, cout, cpin, cpout):
    # 1x1 conv over (position, channel) columns == block-diagonal operator,
    # zero-padded to lane-dense [cpin, cpout] (keeps activations lane-dense;
    # the extra MXU flops are hidden while the kernel is memory-bound).
    blk = jnp.kron(jnp.eye(P, dtype=jnp.float32), w[:, :, 0, 0].T)     # [9cin, 9cout]
    full = jnp.zeros((cpin, cpout), jnp.float32).at[:P * cin, :P * cout].set(blk)
    return full.astype(OP_DTYPE)


def _conv3x3_operator(w, cout, cpout):
    # 3x3 conv zero-padded INSIDE each non-overlapping 3x3 block (no cross-block
    # halo -- SBNet gather/scatter modeling assumption) as one block-local
    # [9*cout, 9*cout] operator, lane-padded to [cpout, cpout].
    m = jnp.zeros((P * cout, P * cout), jnp.float32)
    for pp in range(P):
        ph, pw = pp // BS, pp % BS
        for dh in range(3):
            for dw in range(3):
                hh, ww = ph + dh - 1, pw + dw - 1
                if 0 <= hh < BS and 0 <= ww < BS:
                    q = hh * BS + ww
                    m = m.at[q * cout:(q + 1) * cout,
                             pp * cout:(pp + 1) * cout].set(w[:, :, dh, dw].T)
    full = jnp.zeros((cpout, cpout), jnp.float32).at[:P * cout, :P * cout].set(m)
    return full.astype(OP_DTYPE)


def _bias_row(b, cout, cpout):
    return jnp.pad(jnp.tile(b, P), (0, cpout - P * cout))[None, :]


def _bn_affine(sq, count, cout, cpout, gamma, beta, bias):
    """Fold per-tile bias-shifted column sums into per-channel BN scale/shift."""
    rows = sq.reshape(-1, 8, 2 * cpout)[:, 0, :]             # one row per tile
    s = rows[:, :P * cout].reshape(-1, P, cout).sum(axis=(0, 1))
    q = rows[:, cpout:cpout + P * cout].reshape(-1, P, cout).sum(axis=(0, 1))
    denom = jnp.maximum(count, 1.0) * float(P)               # all-inactive guard
    ms = s / denom                                           # E[y - b]
    var = jnp.maximum(q / denom - ms * ms, 0.0)              # shift-invariant var
    mean = ms + bias
    scale = gamma * lax.rsqrt(var + EPS)
    shift = beta - mean * scale
    pad = cpout - P * cout
    return (jnp.pad(jnp.tile(scale, P), (0, pad))[None, :],
            jnp.pad(jnp.tile(shift, P), (0, pad))[None, :])


def _blockify(x):
    n, c, h, w = x.shape
    kb = n * (h // BS) * (w // BS)
    return (x.reshape(n, c, h // BS, BS, w // BS, BS)
             .transpose(0, 2, 4, 3, 5, 1)
             .reshape(kb, P * c))


def _unblockify(yf, n, c, h, w):
    return (yf.reshape(n, h // BS, w // BS, BS, BS, c)
              .transpose(0, 5, 1, 3, 2, 4)
              .reshape(n, c, h, w))


def _active_flags(mask):
    # ReduceMask: block active iff max over its 3x3 mask patch > 0.
    n, _, h, w = mask.shape
    kb = n * (h // BS) * (w // BS)
    mk = (mask[:, 0].reshape(n, h // BS, BS, w // BS, BS)
          .transpose(0, 1, 3, 2, 4).reshape(kb, P))
    return (jnp.max(mk, axis=1) > 0.0).astype(jnp.float32)


# ----------------------------- SparseBlock / model ---------------------------
def _sparse_block(xb, scal, count, p, cin, cout, tkb):
    cpin = xb.shape[1]
    cpout = _round_up(P * cout, LANE)

    m1t = _conv1x1_operator(p['w1'], cin, cout, cpin, cpout)
    b1 = _bias_row(p['b1'], cout, cpout)
    m2t = _conv3x3_operator(p['w2'], cout, cpout)
    b2 = _bias_row(p['b2'], cout, cpout)

    # pass 1: conv1 + BN1 partial statistics (active tiles only)
    y1p, sq1 = _conv_stats(scal, xb, m1t, b1, tkb)
    sc1, sh1 = _bn_affine(sq1, count, cout, cpout, p['g1'], p['be1'], p['b1'])

    # pass 2: bn1 + relu -> conv2 + BN2 partial statistics (active tiles only)
    y2p, sq2 = _bnrelu_conv_stats(scal, y1p, sc1, sh1, m2t, b2, tkb)
    sc2, sh2 = _bn_affine(sq2, count, cout, cpout, p['g2'], p['be2'], p['b2'])

    # pass 3: bn2 + relu -> SparseScatter(add=True) onto ybase (ALL rows)
    if cin != cout:
        mdt = _conv1x1_operator(p['wd'], cin, cout, cpin, cpout)
        bd = _bias_row(p['bd'], cout, cpout)
        return _bnrelu_ds_scatter(scal, y2p, sc2, sh2, xb, mdt, bd, tkb)
    return _bnrelu_scatter(scal, y2p, sc2, sh2, xb, tkb)     # ybase = x exactly


def sparse_residual_units(x, mask, params):
    # TODO(synk): partial edge blocks (H or W not divisible by 3) are not handled
    # (SBNet pads them); demo shapes are chosen divisible by the block size.
    n, cin, h, w = x.shape
    kb = n * (h // BS) * (w // BS)
    couts = [p['w1'].shape[0] for p in params]
    cp_max = max([_round_up(P * cin, LANE)] + [_round_up(P * c, LANE) for c in couts])

    # --- KB tile sized by BYTES (amortize per-step overhead), minimal padding ---
    cap = _vmem_capacity()
    row_bytes = 4 * cp_max                                   # widest f32 stream/row
    op_bytes = 2 * OP_BYTES * cp_max * cp_max                # operator, 2 buffers
    tile_rows_target = max(8, TARGET_TILE_BYTES // row_bytes)
    tile_rows_vmem = max(8, (int(0.55 * cap) - op_bytes) // (3 * 2 * row_bytes))
    tkb_cap = max(8, min(8192, tile_rows_target, tile_rows_vmem))
    g = max(1, _cdiv(kb, tkb_cap))
    if g == 1 and kb >= 16:
        g = 2                                  # keep both v7x TensorCores busy
    tkb = _round_up(_cdiv(kb, g), 8)
    kbpad = g * tkb

    # --- blockify ONCE, ReduceMask ONCE, compact ACTIVE rows to the front ------
    xb = _blockify(x)                                        # (kb, 9*cin) f32
    act = _active_flags(mask)                                # (kb,)
    count_i = jnp.sum(act).astype(jnp.int32)
    keys = (1 - act.astype(jnp.int32)) * (kb + 1) + jnp.arange(kb, dtype=jnp.int32)
    perm = jnp.argsort(keys)                                 # active rows first
    inv = jnp.argsort(perm)
    cpin = _round_up(P * cin, LANE)
    xb = jnp.pad(xb[perm], ((0, kbpad - kb), (0, cpin - P * cin)))
    n_tiles = jnp.maximum(jnp.int32(1), (count_i + tkb - 1) // tkb)
    scal = jnp.stack([n_tiles, count_i]).astype(jnp.int32)   # scalar-prefetched
    count_f = count_i.astype(jnp.float32)

    for p in params:
        cout = p['w1'].shape[0]
        xb = _sparse_block(xb, scal, count_f, p, cin, cout, tkb)
        cin = cout
    yb = xb[:kb][inv][:, :P * cin]                           # un-compact ONCE
    return _unblockify(yb, n, cin, h, w)


# ------------------------------ pure-JAX reference ---------------------------
def _reference(x, mask, params):
    hp = lax.Precision.HIGHEST
    for p in params:
        n, cin, h, w = x.shape
        cout = p['w1'].shape[0]
        kb = n * (h // BS) * (w // BS)
        mk = (mask[:, 0].reshape(n, h // BS, BS, w // BS, BS)
              .transpose(0, 1, 3, 2, 4).reshape(kb, P))
        active = (mk.max(axis=1) > 0.0).astype(jnp.float32)
        xb = (x.reshape(n, cin, h // BS, BS, w // BS, BS)
              .transpose(0, 2, 4, 1, 3, 5).reshape(kb, cin, BS, BS))

        def bn(z, g, be):
            c = active.sum() * float(P)
            w4 = active[:, None, None, None]
            mean = (z * w4).sum(axis=(0, 2, 3)) / c
            var = ((z * z) * w4).sum(axis=(0, 2, 3)) / c - mean ** 2
            return ((z - mean[None, :, None, None]) * lax.rsqrt(var + EPS)[None, :, None, None]
                    * g[None, :, None, None] + be[None, :, None, None])

        y1 = jnp.einsum('kchw,oc->kohw', xb, p['w1'][:, :, 0, 0],
                        precision=hp) + p['b1'][None, :, None, None]
        y1 = jax.nn.relu(bn(y1, p['g1'], p['be1']))
        y2 = lax.conv_general_dilated(y1, p['w2'], (1, 1), 'SAME',
                                      dimension_numbers=('NCHW', 'OIHW', 'NCHW'),
                                      precision=hp) + p['b2'][None, :, None, None]
        y2 = jax.nn.relu(bn(y2, p['g2'], p['be2']))
        if cin != cout:
            ybase = jnp.einsum('nchw,oc->nohw', x, p['wd'][:, :, 0, 0],
                               precision=hp) + p['bd'][None, :, None, None]
        else:
            ybase = x
        yb = (ybase.reshape(n, cout, h // BS, BS, w // BS, BS)
              .transpose(0, 2, 4, 1, 3, 5).reshape(kb, cout, BS, BS))
        yb = yb + active[:, None, None, None] * y2
        x = (yb.reshape(n, h // BS, w // BS, cout, BS, BS)
             .transpose(0, 3, 1, 4, 2, 5).reshape(n, cout, h, w))
    return x


# ------------------------------ params & main --------------------------------
def init_params(key, n_blocks, in_channels, out_channels):
    params = []
    for i in range(n_blocks):
        cin, cout = in_channels[i], out_channels[i]
        ks = jax.random.split(jax.random.fold_in(key, i), 10)
        params.append(dict(
            w1=0.2 * jax.random.normal(ks[0], (cout, cin, 1, 1), jnp.float32),
            b1=0.1 * jax.random.normal(ks[1], (cout,), jnp.float32),
            w2=0.2 * jax.random.normal(ks[2], (cout, cout, 3, 3), jnp.float32),
            b2=0.1 * jax.random.normal(ks[3], (cout,), jnp.float32),
            wd=0.2 * jax.random.normal(ks[4], (cout, cin, 1, 1), jnp.float32),
            bd=0.1 * jax.random.normal(ks[5], (cout,), jnp.float32),
            g1=1.0 + 0.1 * jax.random.normal(ks[6], (cout,), jnp.float32),
            be1=0.1 * jax.random.normal(ks[7], (cout,), jnp.float32),
            g2=1.0 + 0.1 * jax.random.normal(ks[8], (cout,), jnp.float32),
            be2=0.1 * jax.random.normal(ks[9], (cout,), jnp.float32),
        ))
    return params


if __name__ == "__main__":
    key = jax.random.PRNGKey(0)
    n_blocks = 2
    in_channels = [4, 8]
    out_channels = [8, 8]
    N, H, W = 2, 12, 12

    kx, km, kp = jax.random.split(key, 3)
    x = jax.random.normal(kx, (N, in_channels[0], H, W), jnp.float32)
    # sparse mask (~35-40% of 3x3 blocks active) so the active-only path is exercised
    mask = (jax.random.uniform(km, (N, 1, H, W)) > 0.95).astype(jnp.float32)
    mask = mask.at[:, :, 0, 0].set(1.0)     # guarantee at least one active block

    params = init_params(kp, n_blocks, in_channels, out_channels)

    y = jax.jit(sparse_residual_units)(x, mask, params)
    y = jax.block_until_ready(y)

    y_ref = _reference(x, mask, params)
    err = float(jnp.max(jnp.abs(y - y_ref)))
    # tolerance sized for bf16 operator / intra-unit activation storage
    assert jnp.allclose(y, y_ref, atol=1e-1, rtol=1e-1), f"max abs err {err}"
    print("KERNEL_OK")
</pallas_src>

<mosaic_0001>
module attributes {stable_mosaic.version = 11 : i64} {
  func.func @_conv_stats_kernel(%arg0: i32, %arg1: memref<2xi32, #tpu.memory_space<smem>>, %arg2: memref<16x128xf32, #tpu.memory_space<vmem>>, %arg3: memref<128x128xbf16, #tpu.memory_space<vmem>>, %arg4: memref<1x128xf32, #tpu.memory_space<vmem>>, %arg5: memref<16x128xbf16, #tpu.memory_space<vmem>>, %arg6: memref<8x256xf32, #tpu.memory_space<vmem>>) attributes {dimension_semantics = [#tpu.dimension_semantics<parallel>], iteration_bounds = array<i64: 2>, scalar_prefetch = 1 : i64, scratch_operands = 0 : i64, tpu.core_type = #tpu.core_type<tc>, window_params = [{transform_indices = @transform_0, window_bounds = array<i64: 16, 128>}, {pipeline_mode = #tpu.pipeline_mode<synchronous>, transform_indices = @transform_1, window_bounds = array<i64: 128, 128>}, {pipeline_mode = #tpu.pipeline_mode<synchronous>, transform_indices = @transform_2, window_bounds = array<i64: 1, 128>}, {transform_indices = @transform_3, window_bounds = array<i64: 16, 128>}, {transform_indices = @transform_4, window_bounds = array<i64: 8, 256>}]} {
    %c0 = arith.constant 0 : index
    %c0_0 = arith.constant 0 : index
    %0 = vector.load %arg2[%c0, %c0_0] : memref<16x128xf32, #tpu.memory_space<vmem>>, vector<16x128xf32>
    %1 = arith.truncf %0 : vector<16x128xf32> to vector<16x128xbf16>
    %c0_1 = arith.constant 0 : index
    %c0_2 = arith.constant 0 : index
    %2 = vector.load %arg3[%c0_1, %c0_2] : memref<128x128xbf16, #tpu.memory_space<vmem>>, vector<128x128xbf16>
    %cst = arith.constant dense<0.000000e+00> : vector<16x128xf32>
    %3 = tpu.matmul %1, %2, %cst {dimension_numbers = #tpu.dot_dimension_numbers<[1], [0], [0], [1], [0, 0, 1, 1], [], []>} : vector<16x128xbf16>, vector<128x128xbf16>, vector<16x128xf32> -> vector<16x128xf32>
    %c0_3 = arith.constant 0 : index
    %c0_4 = arith.constant 0 : index
    %4 = vector.load %arg4[%c0_3, %c0_4] : memref<1x128xf32, #tpu.memory_space<vmem>>, vector<1x128xf32>
    %5 = vector.broadcast %4 : vector<1x128xf32> to vector<16x128xf32>
    %6 = arith.addf %3, %5 : vector<16x128xf32>
    %7 = arith.truncf %6 : vector<16x128xf32> to vector<16x128xbf16>
    %c0_5 = arith.constant 0 : index
    %c0_6 = arith.constant 0 : index
    %8 = vector.load %arg5[%c0_5, %c0_6] : memref<16x128xbf16, #tpu.memory_space<vmem>>, vector<16x128xbf16>
    tpu.vector_store %arg5[%c0_5, %c0_6], %7 {strides = array<i32>} : memref<16x128xbf16, #tpu.memory_space<vmem>>, vector<16x128xbf16>,
    %c16_i32 = arith.constant 16 : i32
    %9 = arith.muli %arg0, %c16_i32 : i32
    %10 = tpu.iota {dimensions = array<i32: 0>} : vector<16x1xi32>
    %11 = vector.broadcast %9 : i32 to vector<16x1xi32>
    %12 = arith.addi %11, %10 : vector<16x1xi32>
    %c1 = arith.constant 1 : index
    %13 = memref.load %arg1[%c1] : memref<2xi32, #tpu.memory_space<smem>>
    %14 = vector.broadcast %13 : i32 to vector<16x1xi32>
    %15 = arith.cmpi slt, %12, %14 : vector<16x1xi32>
    %16 = arith.extui %15 : vector<16x1xi1> to vector<16x1xi32>
    %17 = arith.sitofp %16 : vector<16x1xi32> to vector<16x1xf32>
    %c0_7 = arith.constant 0 : index
    %c0_8 = arith.constant 0 : index
    %18 = vector.load %arg4[%c0_7, %c0_8] : memref<1x128xf32, #tpu.memory_space<vmem>>, vector<1x128xf32>
    %19 = vector.broadcast %18 : vector<1x128xf32> to vector<16x128xf32>
    %20 = arith.subf %6, %19 : vector<16x128xf32>
    %21 = vector.broadcast %17 : vector<16x1xf32> to vector<16x128xf32>
    %22 = arith.mulf %21, %20 : vector<16x128xf32>
    %cst_9 = arith.constant dense<0.000000e+00> : vector<128xf32>
    %23 = vector.multi_reduction <add>, %22, %cst_9 [0] : vector<16x128xf32> to vector<128xf32>
    %24 = vector.shape_cast %23 : vector<128xf32> to vector<1x128xf32>
    %25 = vector.shape_cast %24 : vector<1x128xf32> to vector<1x128xf32>
    %26 = vector.broadcast %25 : vector<1x128xf32> to vector<8x128xf32>
    %c0_10 = arith.constant 0 : index
    %c0_11 = arith.constant 0 : index
    %27 = vector.load %arg6[%c0_10, %c0_11] : memref<8x256xf32, #tpu.memory_space<vmem>>, vector<8x128xf32>
    tpu.vector_store %arg6[%c0_10, %c0_11], %26 {strides = array<i32>} : memref<8x256xf32, #tpu.memory_space<vmem>>, vector<8x128xf32>,
    %28 = arith.mulf %22, %20 : vector<16x128xf32>
    %cst_12 = arith.constant dense<0.000000e+00> : vector<128xf32>
    %29 = vector.multi_reduction <add>, %28, %cst_12 [0] : vector<16x128xf32> to vector<128xf32>
    %30 = vector.shape_cast %29 : vector<128xf32> to vector<1x128xf32>
    %31 = vector.shape_cast %30 : vector<1x128xf32> to vector<1x128xf32>
    %32 = vector.broadcast %31 : vector<1x128xf32> to vector<8x128xf32>
    %c0_13 = arith.constant 0 : index
    %c128 = arith.constant 128 : index
    %33 = vector.load %arg6[%c0_13, %c128] : memref<8x256xf32, #tpu.memory_space<vmem>>, vector<8x128xf32>
    tpu.vector_store %arg6[%c0_13, %c128], %32 {strides = array<i32>} : memref<8x256xf32, #tpu.memory_space<vmem>>, vector<8x128xf32>,
    return
  }
  func.func @transform_0(%arg0: i32, %arg1: memref<2xi32, #tpu.memory_space<smem>>) -> (i32, i32) {
    %c0 = arith.constant 0 : index
    %0 = memref.load %arg1[%c0] : memref<2xi32, #tpu.memory_space<smem>>
    %c1_i32 = arith.constant 1 : i32
    %1 = arith.subi %0, %c1_i32 : i32
    %2 = arith.minsi %arg0, %1 : i32
    %c0_i32 = arith.constant 0 : i32
    %c0_i32_0 = arith.constant 0 : i32
    return %2, %c0_i32 : i32, i32
  }
  func.func @transform_1(%arg0: i32, %arg1: memref<2xi32, #tpu.memory_space<smem>>) -> (i32, i32) {
    %c0_i32 = arith.constant 0 : i32
    %c0_i32_0 = arith.constant 0 : i32
    %c0_i32_1 = arith.constant 0 : i32
    return %c0_i32, %c0_i32_0 : i32, i32
  }
  func.func @transform_2(%arg0: i32, %arg1: memref<2xi32, #tpu.memory_space<smem>>) -> (i32, i32) {
    %c0_i32 = arith.constant 0 : i32
    %c0_i32_0 = arith.constant 0 : i32
    %c0_i32_1 = arith.constant 0 : i32
    return %c0_i32, %c0_i32_0 : i32, i32
  }
  func.func @transform_3(%arg0: i32, %arg1: memref<2xi32, #tpu.memory_space<smem>>) -> (i32, i32) {
    %c0 = arith.constant 0 : index
    %0 = memref.load %arg1[%c0] : memref<2xi32, #tpu.memory_space<smem>>
    %c1_i32 = arith.constant 1 : i32
    %1 = arith.subi %0, %c1_i32 : i32
    %2 = arith.minsi %arg0, %1 : i32
    %c0_i32 = arith.constant 0 : i32
    %c0_i32_0 = arith.constant 0 : i32
    return %2, %c0_i32 : i32, i32
  }
  func.func @transform_4(%arg0: i32, %arg1: memref<2xi32, #tpu.memory_space<smem>>) -> (i32, i32) {
    %c0_i32 = arith.constant 0 : i32
    %c0_i32_0 = arith.constant 0 : i32
    return %arg0, %c0_i32 : i32, i32
  }
}

module attributes {stable_mosaic.version = 11 : i64} {
  func.func @_bnrelu_conv_stats_kernel(%arg0: i32, %arg1: memref<2xi32, #tpu.memory_space<smem>>, %arg2: memref<16x128xbf16, #tpu.memory_space<vmem>>, %arg3: memref<1x128xf32, #tpu.memory_space<vmem>>, %arg4: memref<1x128xf32, #tpu.memory_space<vmem>>, %arg5: memref<128x128xbf16, #tpu.memory_space<vmem>>, %arg6: memref<1x128xf32, #tpu.memory_space<vmem>>, %arg7: memref<16x128xbf16, #tpu.memory_space<vmem>>, %arg8: memref<8x256xf32, #tpu.memory_space<vmem>>) attributes {dimension_semantics = [#tpu.dimension_semantics<parallel>], iteration_bounds = array<i64: 2>, scalar_prefetch = 1 : i64, scratch_operands = 0 : i64, tpu.core_type = #tpu.core_type<tc>, window_params = [{transform_indices = @transform_0, window_bounds = array<i64: 16, 128>}, {pipeline_mode = #tpu.pipeline_mode<synchronous>, transform_indices = @transform_1, window_bounds = array<i64: 1, 128>}, {pipeline_mode = #tpu.pipeline_mode<synchronous>, transform_indices = @transform_2, window_bounds = array<i64: 1, 128>}, {pipeline_mode = #tpu.pipeline_mode<synchronous>, transform_indices = @transform_3, window_bounds = array<i64: 128, 128>}, {pipeline_mode = #tpu.pipeline_mode<synchronous>, transform_indices = @transform_4, window_bounds = array<i64: 1, 128>}, {transform_indices = @transform_5, window_bounds = array<i64: 16, 128>}, {transform_indices = @transform_6, window_bounds = array<i64: 8, 256>}]} {
    %c0 = arith.constant 0 : index
    %c0_0 = arith.constant 0 : index
    %0 = vector.load %arg2[%c0, %c0_0] : memref<16x128xbf16, #tpu.memory_space<vmem>>, vector<16x128xbf16>
    %c0_1 = arith.constant 0 : index
    %c0_2 = arith.constant 0 : index
    %1 = vector.load %arg3[%c0_1, %c0_2] : memref<1x128xf32, #tpu.memory_space<vmem>>, vector<1x128xf32>
    %2 = arith.extf %0 : vector<16x128xbf16> to vector<16x128xf32>
    %3 = vector.broadcast %1 : vector<1x128xf32> to vector<16x128xf32>
    %4 = arith.mulf %2, %3 : vector<16x128xf32>
    %c0_3 = arith.constant 0 : index
    %c0_4 = arith.constant 0 : index
    %5 = vector.load %arg4[%c0_3, %c0_4] : memref<1x128xf32, #tpu.memory_space<vmem>>, vector<1x128xf32>
    %6 = vector.broadcast %5 : vector<1x128xf32> to vector<16x128xf32>
    %7 = arith.addf %4, %6 : vector<16x128xf32>
    %cst = arith.constant 0.000000e+00 : f32
    %8 = vector.broadcast %cst : f32 to vector<16x128xf32>
    %9 = arith.maximumf %7, %8 : vector<16x128xf32>
    %10 = arith.truncf %9 : vector<16x128xf32> to vector<16x128xbf16>
    %c0_5 = arith.constant 0 : index
    %c0_6 = arith.constant 0 : index
    %11 = vector.load %arg5[%c0_5, %c0_6] : memref<128x128xbf16, #tpu.memory_space<vmem>>, vector<128x128xbf16>
    %cst_7 = arith.constant dense<0.000000e+00> : vector<16x128xf32>
    %12 = tpu.matmul %10, %11, %cst_7 {dimension_numbers = #tpu.dot_dimension_numbers<[1], [0], [0], [1], [0, 0, 1, 1], [], []>} : vector<16x128xbf16>, vector<128x128xbf16>, vector<16x128xf32> -> vector<16x128xf32>
    %c0_8 = arith.constant 0 : index
    %c0_9 = arith.constant 0 : index
    %13 = vector.load %arg6[%c0_8, %c0_9] : memref<1x128xf32, #tpu.memory_space<vmem>>, vector<1x128xf32>
    %14 = vector.broadcast %13 : vector<1x128xf32> to vector<16x128xf32>
    %15 = arith.addf %12, %14 : vector<16x128xf32>
    %16 = arith.truncf %15 : vector<16x128xf32> to vector<16x128xbf16>
    %c0_10 = arith.constant 0 : index
    %c0_11 = arith.constant 0 : index
    %17 = vector.load %arg7[%c0_10, %c0_11] : memref<16x128xbf16, #tpu.memory_space<vmem>>, vector<16x128xbf16>
    tpu.vector_store %arg7[%c0_10, %c0_11], %16 {strides = array<i32>} : memref<16x128xbf16, #tpu.memory_space<vmem>>, vector<16x128xbf16>,
    %c16_i32 = arith.constant 16 : i32
    %18 = arith.muli %arg0, %c16_i32 : i32
    %19 = tpu.iota {dimensions = array<i32: 0>} : vector<16x1xi32>
    %20 = vector.broadcast %18 : i32 to vector<16x1xi32>
    %21 = arith.addi %20, %19 : vector<16x1xi32>
    %c1 = arith.constant 1 : index
    %22 = memref.load %arg1[%c1] : memref<2xi32, #tpu.memory_space<smem>>
    %23 = vector.broadcast %22 : i32 to vector<16x1xi32>
    %24 = arith.cmpi slt, %21, %23 : vector<16x1xi32>
    %25 = arith.extui %24 : vector<16x1xi1> to vector<16x1xi32>
    %26 = arith.sitofp %25 : vector<16x1xi32> to vector<16x1xf32>
    %c0_12 = arith.constant 0 : index
    %c0_13 = arith.constant 0 : index
    %27 = vector.load %arg6[%c0_12, %c0_13] : memref<1x128xf32, #tpu.memory_space<vmem>>, vector<1x128xf32>
    %28 = vector.broadcast %27 : vector<1x128xf32> to vector<16x128xf32>
    %29 = arith.subf %15, %28 : vector<16x128xf32>
    %30 = vector.broadcast %26 : vector<16x1xf32> to vector<16x128xf32>
    %31 = arith.mulf %30, %29 : vector<16x128xf32>
    %cst_14 = arith.constant dense<0.000000e+00> : vector<128xf32>
    %32 = vector.multi_reduction <add>, %31, %cst_14 [0] : vector<16x128xf32> to vector<128xf32>
    %33 = vector.shape_cast %32 : vector<128xf32> to vector<1x128xf32>
    %34 = vector.shape_cast %33 : vector<1x128xf32> to vector<1x128xf32>
    %35 = vector.broadcast %34 : vector<1x128xf32> to vector<8x128xf32>
    %c0_15 = arith.constant 0 : index
    %c0_16 = arith.constant 0 : index
    %36 = vector.load %arg8[%c0_15, %c0_16] : memref<8x256xf32, #tpu.memory_space<vmem>>, vector<8x128xf32>
    tpu.vector_store %arg8[%c0_15, %c0_16], %35 {strides = array<i32>} : memref<8x256xf32, #tpu.memory_space<vmem>>, vector<8x128xf32>,
    %37 = arith.mulf %31, %29 : vector<16x128xf32>
    %cst_17 = arith.constant dense<0.000000e+00> : vector<128xf32>
    %38 = vector.multi_reduction <add>, %37, %cst_17 [0] : vector<16x128xf32> to vector<128xf32>
    %39 = vector.shape_cast %38 : vector<128xf32> to vector<1x128xf32>
    %40 = vector.shape_cast %39 : vector<1x128xf32> to vector<1x128xf32>
    %41 = vector.broadcast %40 : vector<1x128xf32> to vector<8x128xf32>
    %c0_18 = arith.constant 0 : index
    %c128 = arith.constant 128 : index
    %42 = vector.load %arg8[%c0_18, %c128] : memref<8x256xf32, #tpu.memory_space<vmem>>, vector<8x128xf32>
    tpu.vector_store %arg8[%c0_18, %c128], %41 {strides = array<i32>} : memref<8x256xf32, #tpu.memory_space<vmem>>, vector<8x128xf32>,
    return
  }
  func.func @transform_0(%arg0: i32, %arg1: memref<2xi32, #tpu.memory_space<smem>>) -> (i32, i32) {
    %c0 = arith.constant 0 : index
    %0 = memref.load %arg1[%c0] : memref<2xi32, #tpu.memory_space<smem>>
    %c1_i32 = arith.constant 1 : i32
    %1 = arith.subi %0, %c1_i32 : i32
    %2 = arith.minsi %arg0, %1 : i32
    %c0_i32 = arith.constant 0 : i32
    %c0_i32_0 = arith.constant 0 : i32
    return %2, %c0_i32 : i32, i32
  }
  func.func @transform_1(%arg0: i32, %arg1: memref<2xi32, #tpu.memory_space<smem>>) -> (i32, i32) {
    %c0_i32 = arith.constant 0 : i32
    %c0_i32_0 = arith.constant 0 : i32
    %c0_i32_1 = arith.constant 0 : i32
    return %c0_i32, %c0_i32_0 : i32, i32
  }
  func.func @transform_2(%arg0: i32, %arg1: memref<2xi32, #tpu.memory_space<smem>>) -> (i32, i32) {
    %c0_i32 = arith.constant 0 : i32
    %c0_i32_0 = arith.constant 0 : i32
    %c0_i32_1 = arith.constant 0 : i32
    return %c0_i32, %c0_i32_0 : i32, i32
  }
  func.func @transform_3(%arg0: i32, %arg1: memref<2xi32, #tpu.memory_space<smem>>) -> (i32, i32) {
    %c0_i32 = arith.constant 0 : i32
    %c0_i32_0 = arith.constant 0 : i32
    %c0_i32_1 = arith.constant 0 : i32
    return %c0_i32, %c0_i32_0 : i32, i32
  }
  func.func @transform_4(%arg0: i32, %arg1: memref<2xi32, #tpu.memory_space<smem>>) -> (i32, i32) {
    %c0_i32 = arith.constant 0 : i32
    %c0_i32_0 = arith.constant 0 : i32
    %c0_i32_1 = arith.constant 0 : i32
    return %c0_i32, %c0_i32_0 : i32, i32
  }
  func.func @transform_5(%arg0: i32, %arg1: memref<2xi32, #tpu.memory_space<smem>>) -> (i32, i32) {
    %c0 = arith.constant 0 : index
    %0 = memref.load %arg1[%c0] : memref<2xi32, #tpu.memory_space<smem>>
    %c1_i32 = arith.constant 1 : i32
    %1 = arith.subi %0, %c1_i32 : i32
    %2 = arith.minsi %arg0, %1 : i32
    %c0_i32 = arith.constant 0 : i32
    %c0_i32_0 = arith.constant 0 : i32
    return %2, %c0_i32 : i32, i32
  }
  func.func @transform_6(%arg0: i32, %arg1: memref<2xi32, #tpu.memory_space<smem>>) -> (i32, i32) {
    %c0_i32 = arith.constant 0 : i32
    %c0_i32_0 = arith.constant 0 : i32
    return %arg0, %c0_i32 : i32, i32
  }
}

module attributes {stable_mosaic.version = 11 : i64} {
  func.func @_bnrelu_ds_scatter_kernel(%arg0: i32, %arg1: memref<2xi32, #tpu.memory_space<smem>>, %arg2: memref<16x128xbf16, #tpu.memory_space<vmem>>, %arg3: memref<1x128xf32, #tpu.memory_space<vmem>>, %arg4: memref<1x128xf32, #tpu.memory_space<vmem>>, %arg5: memref<16x128xf32, #tpu.memory_space<vmem>>, %arg6: memref<128x128xbf16, #tpu.memory_space<vmem>>, %arg7: memref<1x128xf32, #tpu.memory_space<vmem>>, %arg8: memref<16x128xf32, #tpu.memory_space<vmem>>) attributes {dimension_semantics = [#tpu.dimension_semantics<parallel>], iteration_bounds = array<i64: 2>, scalar_prefetch = 1 : i64, scratch_operands = 0 : i64, tpu.core_type = #tpu.core_type<tc>, window_params = [{transform_indices = @transform_0, window_bounds = array<i64: 16, 128>}, {pipeline_mode = #tpu.pipeline_mode<synchronous>, transform_indices = @transform_1, window_bounds = array<i64: 1, 128>}, {pipeline_mode = #tpu.pipeline_mode<synchronous>, transform_indices = @transform_2, window_bounds = array<i64: 1, 128>}, {transform_indices = @transform_3, window_bounds = array<i64: 16, 128>}, {pipeline_mode = #tpu.pipeline_mode<synchronous>, transform_indices = @transform_4, window_bounds = array<i64: 128, 128>}, {pipeline_mode = #tpu.pipeline_mode<synchronous>, transform_indices = @transform_5, window_bounds = array<i64: 1, 128>}, {transform_indices = @transform_6, window_bounds = array<i64: 16, 128>}]} {
    %c16_i32 = arith.constant 16 : i32
    %0 = arith.muli %arg0, %c16_i32 : i32
    %1 = tpu.iota {dimensions = array<i32: 0>} : vector<16x1xi32>
    %2 = vector.broadcast %0 : i32 to vector<16x1xi32>
    %3 = arith.addi %2, %1 : vector<16x1xi32>
    %c1 = arith.constant 1 : index
    %4 = memref.load %arg1[%c1] : memref<2xi32, #tpu.memory_space<smem>>
    %5 = vector.broadcast %4 : i32 to vector<16x1xi32>
    %6 = arith.cmpi slt, %3, %5 : vector<16x1xi32>
    %7 = arith.extui %6 : vector<16x1xi1> to vector<16x1xi32>
    %8 = arith.sitofp %7 : vector<16x1xi32> to vector<16x1xf32>
    %c0 = arith.constant 0 : index
    %c0_0 = arith.constant 0 : index
    %9 = vector.load %arg2[%c0, %c0_0] : memref<16x128xbf16, #tpu.memory_space<vmem>>, vector<16x128xbf16>
    %c0_1 = arith.constant 0 : index
    %c0_2 = arith.constant 0 : index
    %10 = vector.load %arg3[%c0_1, %c0_2] : memref<1x128xf32, #tpu.memory_space<vmem>>, vector<1x128xf32>
    %11 = arith.extf %9 : vector<16x128xbf16> to vector<16x128xf32>
    %12 = vector.broadcast %10 : vector<1x128xf32> to vector<16x128xf32>
    %13 = arith.mulf %11, %12 : vector<16x128xf32>
    %c0_3 = arith.constant 0 : index
    %c0_4 = arith.constant 0 : index
    %14 = vector.load %arg4[%c0_3, %c0_4] : memref<1x128xf32, #tpu.memory_space<vmem>>, vector<1x128xf32>
    %15 = vector.broadcast %14 : vector<1x128xf32> to vector<16x128xf32>
    %16 = arith.addf %13, %15 : vector<16x128xf32>
    %cst = arith.constant 0.000000e+00 : f32
    %17 = vector.broadcast %cst : f32 to vector<16x128xf32>
    %18 = arith.maximumf %16, %17 : vector<16x128xf32>
    %c0_5 = arith.constant 0 : index
    %c0_6 = arith.constant 0 : index
    %19 = vector.load %arg5[%c0_5, %c0_6] : memref<16x128xf32, #tpu.memory_space<vmem>>, vector<16x128xf32>
    %20 = arith.truncf %19 : vector<16x128xf32> to vector<16x128xbf16>
    %c0_7 = arith.constant 0 : index
    %c0_8 = arith.constant 0 : index
    %21 = vector.load %arg6[%c0_7, %c0_8] : memref<128x128xbf16, #tpu.memory_space<vmem>>, vector<128x128xbf16>
    %cst_9 = arith.constant dense<0.000000e+00> : vector<16x128xf32>
    %22 = tpu.matmul %20, %21, %cst_9 {dimension_numbers = #tpu.dot_dimension_numbers<[1], [0], [0], [1], [0, 0, 1, 1], [], []>} : vector<16x128xbf16>, vector<128x128xbf16>, vector<16x128xf32> -> vector<16x128xf32>
    %c0_10 = arith.constant 0 : index
    %c0_11 = arith.constant 0 : index
    %23 = vector.load %arg7[%c0_10, %c0_11] : memref<1x128xf32, #tpu.memory_space<vmem>>, vector<1x128xf32>
    %24 = vector.broadcast %23 : vector<1x128xf32> to vector<16x128xf32>
    %25 = arith.addf %22, %24 : vector<16x128xf32>
    %26 = vector.broadcast %8 : vector<16x1xf32> to vector<16x128xf32>
    %27 = arith.mulf %26, %18 : vector<16x128xf32>
    %28 = arith.addf %25, %27 : vector<16x128xf32>
    %c0_12 = arith.constant 0 : index
    %c0_13 = arith.constant 0 : index
    %29 = vector.load %arg8[%c0_12, %c0_13] : memref<16x128xf32, #tpu.memory_space<vmem>>, vector<16x128xf32>
    tpu.vector_store %arg8[%c0_12, %c0_13], %28 {strides = array<i32>} : memref<16x128xf32, #tpu.memory_space<vmem>>, vector<16x128xf32>,
    return
  }
  func.func @transform_0(%arg0: i32, %arg1: memref<2xi32, #tpu.memory_space<smem>>) -> (i32, i32) {
    %c0 = arith.constant 0 : index
    %0 = memref.load %arg1[%c0] : memref<2xi32, #tpu.memory_space<smem>>
    %c1_i32 = arith.constant 1 : i32
    %1 = arith.subi %0, %c1_i32 : i32
    %2 = arith.minsi %arg0, %1 : i32
    %c0_i32 = arith.constant 0 : i32
    %c0_i32_0 = arith.constant 0 : i32
    return %2, %c0_i32 : i32, i32
  }
  func.func @transform_1(%arg0: i32, %arg1: memref<2xi32, #tpu.memory_space<smem>>) -> (i32, i32) {
    %c0_i32 = arith.constant 0 : i32
    %c0_i32_0 = arith.constant 0 : i32
    %c0_i32_1 = arith.constant 0 : i32
    return %c0_i32, %c0_i32_0 : i32, i32
  }
  func.func @transform_2(%arg0: i32, %arg1: memref<2xi32, #tpu.memory_space<smem>>) -> (i32, i32) {
    %c0_i32 = arith.constant 0 : i32
    %c0_i32_0 = arith.constant 0 : i32
    %c0_i32_1 = arith.constant 0 : i32
    return %c0_i32, %c0_i32_0 : i32, i32
  }
  func.func @transform_3(%arg0: i32, %arg1: memref<2xi32, #tpu.memory_space<smem>>) -> (i32, i32) {
    %c0_i32 = arith.constant 0 : i32
    %c0_i32_0 = arith.constant 0 : i32
    return %arg0, %c0_i32 : i32, i32
  }
  func.func @transform_4(%arg0: i32, %arg1: memref<2xi32, #tpu.memory_space<smem>>) -> (i32, i32) {
    %c0_i32 = arith.constant 0 : i32
    %c0_i32_0 = arith.constant 0 : i32
    %c0_i32_1 = arith.constant 0 : i32
    return %c0_i32, %c0_i32_0 : i32, i32
  }
  func.func @transform_5(%arg0: i32, %arg1: memref<2xi32, #tpu.memory_space<smem>>) -> (i32, i32) {
    %c0_i32 = arith.constant 0 : i32
    %c0_i32_0 = arith.constant 0 : i32
    %c0_i32_1 = arith.constant 0 : i32
    return %c0_i32, %c0_i32_0 : i32, i32
  }
  func.func @transform_6(%arg0: i32, %arg1: memref<2xi32, #tpu.memory_space<smem>>) -> (i32, i32) {
    %c0_i32 = arith.constant 0 : i32
    %c0_i32_0 = arith.constant 0 : i32
    return %arg0, %c0_i32 : i32, i32
  }
}

module attributes {stable_mosaic.version = 11 : i64} {
  func.func @_bnrelu_scatter_kernel(%arg0: i32, %arg1: memref<2xi32, #tpu.memory_space<smem>>, %arg2: memref<16x128xbf16, #tpu.memory_space<vmem>>, %arg3: memref<1x128xf32, #tpu.memory_space<vmem>>, %arg4: memref<1x128xf32, #tpu.memory_space<vmem>>, %arg5: memref<16x128xf32, #tpu.memory_space<vmem>>, %arg6: memref<16x128xf32, #tpu.memory_space<vmem>>) attributes {dimension_semantics = [#tpu.dimension_semantics<parallel>], iteration_bounds = array<i64: 2>, scalar_prefetch = 1 : i64, scratch_operands = 0 : i64, tpu.core_type = #tpu.core_type<tc>, window_params = [{transform_indices = @transform_0, window_bounds = array<i64: 16, 128>}, {pipeline_mode = #tpu.pipeline_mode<synchronous>, transform_indices = @transform_1, window_bounds = array<i64: 1, 128>}, {pipeline_mode = #tpu.pipeline_mode<synchronous>, transform_indices = @transform_2, window_bounds = array<i64: 1, 128>}, {transform_indices = @transform_3, window_bounds = array<i64: 16, 128>}, {transform_indices = @transform_4, window_bounds = array<i64: 16, 128>}]} {
    %c16_i32 = arith.constant 16 : i32
    %0 = arith.muli %arg0, %c16_i32 : i32
    %1 = tpu.iota {dimensions = array<i32: 0>} : vector<16x1xi32>
    %2 = vector.broadcast %0 : i32 to vector<16x1xi32>
    %3 = arith.addi %2, %1 : vector<16x1xi32>
    %c1 = arith.constant 1 : index
    %4 = memref.load %arg1[%c1] : memref<2xi32, #tpu.memory_space<smem>>
    %5 = vector.broadcast %4 : i32 to vector<16x1xi32>
    %6 = arith.cmpi slt, %3, %5 : vector<16x1xi32>
    %7 = arith.extui %6 : vector<16x1xi1> to vector<16x1xi32>
    %8 = arith.sitofp %7 : vector<16x1xi32> to vector<16x1xf32>
    %c0 = arith.constant 0 : index
    %c0_0 = arith.constant 0 : index
    %9 = vector.load %arg2[%c0, %c0_0] : memref<16x128xbf16, #tpu.memory_space<vmem>>, vector<16x128xbf16>
    %c0_1 = arith.constant 0 : index
    %c0_2 = arith.constant 0 : index
    %10 = vector.load %arg3[%c0_1, %c0_2] : memref<1x128xf32, #tpu.memory_space<vmem>>, vector<1x128xf32>
    %11 = arith.extf %9 : vector<16x128xbf16> to vector<16x128xf32>
    %12 = vector.broadcast %10 : vector<1x128xf32> to vector<16x128xf32>
    %13 = arith.mulf %11, %12 : vector<16x128xf32>
    %c0_3 = arith.constant 0 : index
    %c0_4 = arith.constant 0 : index
    %14 = vector.load %arg4[%c0_3, %c0_4] : memref<1x128xf32, #tpu.memory_space<vmem>>, vector<1x128xf32>
    %15 = vector.broadcast %14 : vector<1x128xf32> to vector<16x128xf32>
    %16 = arith.addf %13, %15 : vector<16x128xf32>
    %cst = arith.constant 0.000000e+00 : f32
    %17 = vector.broadcast %cst : f32 to vector<16x128xf32>
    %18 = arith.maximumf %16, %17 : vector<16x128xf32>
    %c0_5 = arith.constant 0 : index
    %c0_6 = arith.constant 0 : index
    %19 = vector.load %arg5[%c0_5, %c0_6] : memref<16x128xf32, #tpu.memory_space<vmem>>, vector<16x128xf32>
    %20 = vector.broadcast %8 : vector<16x1xf32> to vector<16x128xf32>
    %21 = arith.mulf %20, %18 : vector<16x128xf32>
    %22 = arith.addf %19, %21 : vector<16x128xf32>
    %c0_7 = arith.constant 0 : index
    %c0_8 = arith.constant 0 : index
    %23 = vector.load %arg6[%c0_7, %c0_8] : memref<16x128xf32, #tpu.memory_space<vmem>>, vector<16x128xf32>
    tpu.vector_store %arg6[%c0_7, %c0_8], %22 {strides = array<i32>} : memref<16x128xf32, #tpu.memory_space<vmem>>, vector<16x128xf32>,
    return
  }
  func.func @transform_0(%arg0: i32, %arg1: memref<2xi32, #tpu.memory_space<smem>>) -> (i32, i32) {
    %c0 = arith.constant 0 : index
    %0 = memref.load %arg1[%c0] : memref<2xi32, #tpu.memory_space<smem>>
    %c1_i32 = arith.constant 1 : i32
    %1 = arith.subi %0, %c1_i32 : i32
    %2 = arith.minsi %arg0, %1 : i32
    %c0_i32 = arith.constant 0 : i32
    %c0_i32_0 = arith.constant 0 : i32
    return %2, %c0_i32 : i32, i32
  }
  func.func @transform_1(%arg0: i32, %arg1: memref<2xi32, #tpu.memory_space<smem>>) -> (i32, i32) {
    %c0_i32 = arith.constant 0 : i32
    %c0_i32_0 = arith.constant 0 : i32
    %c0_i32_1 = arith.constant 0 : i32
    return %c0_i32, %c0_i32_0 : i32, i32
  }
  func.func @transform_2(%arg0: i32, %arg1: memref<2xi32, #tpu.memory_space<smem>>) -> (i32, i32) {
    %c0_i32 = arith.constant 0 : i32
    %c0_i32_0 = arith.constant 0 : i32
    %c0_i32_1 = arith.constant 0 : i32
    return %c0_i32, %c0_i32_0 : i32, i32
  }
  func.func @transform_3(%arg0: i32, %arg1: memref<2xi32, #tpu.memory_space<smem>>) -> (i32, i32) {
    %c0_i32 = arith.constant 0 : i32
    %c0_i32_0 = arith.constant 0 : i32
    return %arg0, %c0_i32 : i32, i32
  }
  func.func @transform_4(%arg0: i32, %arg1: memref<2xi32, #tpu.memory_space<smem>>) -> (i32, i32) {
    %c0_i32 = arith.constant 0 : i32
    %c0_i32_0 = arith.constant 0 : i32
    return %arg0, %c0_i32 : i32, i32
  }
}

</mosaic_0001>

<llo_original>
// kernel: squeeze.106
$region0: #{squeeze.106}
  %s0 = inlined_call_operand.vmem [shape: f32[2,1,12,12], index: 0, kind: input, shape index: {}]
  %s1 = inlined_call_operand.vmem [shape: f32[2,4,3,4,3], index: 1, kind: output, shape index: {}]
  $region1: #{squeeze.106} parent=0
    #allocation0 [shape = 'u8[98304]{0}', space=vmem, size = 0x18000, scoped, tag = 'scoped mem for output reshape']
    #allocation1 [shape = 'u8[49152]{0}', space=vmem, size = 0xc000, scoped, tag = 'scoped mem for input reshape']
    %s3 = sshllo.u32 0, 2
    %s4 = smul.addr 2, 11
    %s5 = scalar_lea.vmem %s0, %s4
    %v6 = vld [vmem:[%s5] sm:%s3]
    %s7 = scalar_lea.vmem [#allocation1], 88
    %8 = vst [vmem:[%s7] sm:%s3] %v6
    %s9 = smul.addr 2, 10
    %s10 = scalar_lea.vmem %s0, %s9
    %v11 = vld [vmem:[%s10] sm:%s3]
    %s12 = scalar_lea.vmem [#allocation1], 80
    %13 = vst [vmem:[%s12] sm:%s3] %v11
    %s14 = smul.addr 2, 9
    %s15 = scalar_lea.vmem %s0, %s14
    %v16 = vld [vmem:[%s15] sm:%s3]
    %s17 = scalar_lea.vmem [#allocation1], 72
    %18 = vst [vmem:[%s17] sm:%s3] %v16
    %s19 = smul.addr 2, 8
    %s20 = scalar_lea.vmem %s0, %s19
    %v21 = vld [vmem:[%s20] sm:%s3]
    %s22 = scalar_lea.vmem [#allocation1], 64
    %23 = vst [vmem:[%s22] sm:%s3] %v21
    %s24 = smul.addr 2, 7
    %s25 = scalar_lea.vmem %s0, %s24
    %v26 = vld [vmem:[%s25] sm:%s3]
    %s27 = scalar_lea.vmem [#allocation1], 56
    %28 = vst [vmem:[%s27] sm:%s3] %v26
    %s29 = smul.addr 2, 6
    %s30 = scalar_lea.vmem %s0, %s29
    %v31 = vld [vmem:[%s30] sm:%s3]
    %s32 = scalar_lea.vmem [#allocation1], 48
    %33 = vst [vmem:[%s32] sm:%s3] %v31
    %s34 = smul.addr 2, 5
    %s35 = scalar_lea.vmem %s0, %s34
    %v36 = vld [vmem:[%s35] sm:%s3]
    %s37 = scalar_lea.vmem [#allocation1], 40
    %38 = vst [vmem:[%s37] sm:%s3] %v36
    %s39 = smul.addr 2, 4
    %s40 = scalar_lea.vmem %s0, %s39
    %v41 = vld [vmem:[%s40] sm:%s3]
    %s42 = scalar_lea.vmem [#allocation1], 32
    %43 = vst [vmem:[%s42] sm:%s3] %v41
    %s44 = smul.addr 2, 3
    %s45 = scalar_lea.vmem %s0, %s44
    %v46 = vld [vmem:[%s45] sm:%s3]
    %s47 = scalar_lea.vmem [#allocation1], 24
    %48 = vst [vmem:[%s47] sm:%s3] %v46
    %s49 = smul.addr 2, 2
    %s50 = scalar_lea.vmem %s0, %s49
    %v51 = vld [vmem:[%s50] sm:%s3]
    %s52 = scalar_lea.vmem [#allocation1], 16
    %53 = vst [vmem:[%s52] sm:%s3] %v51
    %s54 = scalar_lea.vmem %s0, 2
    %v55 = vld [vmem:[%s54] sm:%s3]
    %s56 = scalar_lea.vmem [#allocation1], 8
    %57 = vst [vmem:[%s56] sm:%s3] %v55
    %v58 = vld [vmem:[%s0] sm:%s3]
    %59 = vst [vmem:[#allocation1] sm:%s3] %v58
    %v60 = vld [vmem:[#allocation1] sm:$0x3]
    %vm61 = vcmask 23552
    %62 = vst.msk [vmem:[#allocation0] ss:$8 sm:$0x3] %vm61, %v60
    %s63 = scalar_lea.vmem [#allocation1], 8
    %v64 = vld [vmem:[%s63] sm:$0x3]
    %vm65 = vcmask 23552
    %s66 = scalar_lea.vmem [#allocation0], 16
    %67 = vst.msk [vmem:[%s66] ss:$8 sm:$0x3] %vm65, %v64
    %s68 = scalar_lea.vmem [#allocation1], 16
    %v69 = vld [vmem:[%s68] sm:$0x3]
    %vm70 = vcmask 23552
    %s71 = scalar_lea.vmem [#allocation0], 32
    %72 = vst.msk [vmem:[%s71] ss:$8 sm:$0x3] %vm70, %v69
    %s73 = scalar_lea.vmem [#allocation1], 24
    %v74 = vld [vmem:[%s73] sm:$0x3]
    %vm75 = vcmask 23552
    %s76 = scalar_lea.vmem [#allocation0], 48
    %77 = vst.msk [vmem:[%s76] ss:$8 sm:$0x3] %vm75, %v74
    %s78 = scalar_lea.vmem [#allocation1], 32
    %v79 = vld [vmem:[%s78] sm:$0x3]
    %vm80 = vcmask 23552
    %s81 = scalar_lea.vmem [#allocation0], 64
    %82 = vst.msk [vmem:[%s81] ss:$8 sm:$0x3] %vm80, %v79
    %s83 = scalar_lea.vmem [#allocation1], 40
    %v84 = vld [vmem:[%s83] sm:$0x3]
    %vm85 = vcmask 23552
    %s86 = scalar_lea.vmem [#allocation0], 80
    %87 = vst.msk [vmem:[%s86] ss:$8 sm:$0x3] %vm85, %v84
    %s88 = scalar_lea.vmem [#allocation1], 48
    %v89 = vld [vmem:[%s88] sm:$0x3]
    %vm90 = vcmask 23552
    %s91 = scalar_lea.vmem [#allocation0], 96
    %92 = vst.msk [vmem:[%s91] ss:$8 sm:$0x3] %vm90, %v89
    %s93 = scalar_lea.vmem [#allocation1], 56
    %v94 = vld [vmem:[%s93] sm:$0x3]
    %vm95 = vcmask 23552
    %s96 = scalar_lea.vmem [#allocation0], 112
    %97 = vst.msk [vmem:[%s96] ss:$8 sm:$0x3] %vm95, %v94
    %s98 = scalar_lea.vmem [#allocation1], 64
    %v99 = vld [vmem:[%s98] sm:$0x3]
    %vm100 = vcmask 23552
    %s101 = scalar_lea.vmem [#allocation0], 128
    %102 = vst.msk [vmem:[%s101] ss:$8 sm:$0x3] %vm100, %v99
    %s103 = scalar_lea.vmem [#allocation1], 72
    %v104 = vld [vmem:[%s103] sm:$0x3]
    %vm105 = vcmask 23552
    %s106 = scalar_lea.vmem [#allocation0], 144
    %107 = vst.msk [vmem:[%s106] ss:$8 sm:$0x3] %vm105, %v104
    %s108 = scalar_lea.vmem [#allocation1], 80
    %v109 = vld [vmem:[%s108] sm:$0x3]
    %vm110 = vcmask 23552
    %s111 = scalar_lea.vmem [#allocation0], 160
    %112 = vst.msk [vmem:[%s111] ss:$8 sm:$0x3] %vm110, %v109
    %s113 = scalar_lea.vmem [#allocation1], 88
    %v114 = vld [vmem:[%s113] sm:$0x3]
    %vm115 = vcmask 23552
    %s116 = scalar_lea.vmem [#allocation0], 176
    %117 = vst.msk [vmem:[%s116] ss:$8 sm:$0x3] %vm115, %v114
    %v118 = vld.sshfl [vmem:[#allocation1] sm:$0xff pattern:$0x99999810]
    %s119 = scalar_lea.vmem [#allocation1], 16
    %v120 = vld.sshfl [vmem:[%s119] sm:$0xff pattern:$0x98100000]
    %vm121 = vcmask 1047556
    %v122 = vsel %vm121, %v120, %v118
    %123 = vrot.lane.b32.xlu0 %v122, 125
    %v124 = vpop.permute.xlu0 %123
    %vm125 = vcmask 23552
    %s126 = scalar_lea.vmem [#allocation0], 1
    %127 = vst.msk [vmem:[%s126] ss:$8 sm:$0xf] %vm125, %v124
    %s128 = scalar_lea.vmem [#allocation0], 1
    %129 = vst.msk [vmem:[%s128] ss:$8 sm:$0xf0] %vm125, %v124
    %s130 = scalar_lea.vmem [#allocation1], 32
    %v131 = vld.sshfl [vmem:[%s130] sm:$0xff pattern:$0x99999810]
    %s132 = scalar_lea.vmem [#allocation1], 48
    %v133 = vld.sshfl [vmem:[%s132] sm:$0xff pattern:$0x98100000]
    %vm134 = vcmask 1047556
    %v135 = vsel %vm134, %v133, %v131
    %136 = vrot.lane.b32.xlu0 %v135, 125
    %v137 = vpop.permute.xlu0 %136
    %vm138 = vcmask 23552
    %s139 = scalar_lea.vmem [#allocation0], 65
    %140 = vst.msk [vmem:[%s139] ss:$8 sm:$0xf] %vm138, %v137
    %s141 = scalar_lea.vmem [#allocation0], 65
    %142 = vst.msk [vmem:[%s141] ss:$8 sm:$0xf0] %vm138, %v137
    %s143 = scalar_lea.vmem [#allocation1], 64
    %v144 = vld.sshfl [vmem:[%s143] sm:$0xff pattern:$0x99999810]
    %s145 = scalar_lea.vmem [#allocation1], 80
    %v146 = vld.sshfl [vmem:[%s145] sm:$0xff pattern:$0x98100000]
    %vm147 = vcmask 1047556
    %v148 = vsel %vm147, %v146, %v144
    %149 = vrot.lane.b32.xlu0 %v148, 125
    %v150 = vpop.permute.xlu0 %149
    %vm151 = vcmask 23552
    %s152 = scalar_lea.vmem [#allocation0], 129
    %153 = vst.msk [vmem:[%s152] ss:$8 sm:$0xf] %vm151, %v150
    %s154 = scalar_lea.vmem [#allocation0], 129
    %155 = vst.msk [vmem:[%s154] ss:$8 sm:$0xf0] %vm151, %v150
    %v156 = vld.sshfl [vmem:[#allocation1] sm:$0xff pattern:$0x99999810]
    %s157 = scalar_lea.vmem [#allocation1], 16
    %v158 = vld.sshfl [vmem:[%s157] sm:$0xff pattern:$0x98100000]
    %vm159 = vcmask 1047556
    %v160 = vsel %vm159, %v158, %v156
    %161 = vrot.lane.b32.xlu0 %v160, 122
    %v162 = vpop.permute.xlu0 %161
    %vm163 = vcmask 23552
    %s164 = scalar_lea.vmem [#allocation0], 2
    %165 = vst.msk [vmem:[%s164] ss:$8 sm:$0xf] %vm163, %v162
    %s166 = scalar_lea.vmem [#allocation0], 2
    %167 = vst.msk [vmem:[%s166] ss:$8 sm:$0xf0] %vm163, %v162
    %s168 = scalar_lea.vmem [#allocation1], 32
    %v169 = vld.sshfl [vmem:[%s168] sm:$0xff pattern:$0x99999810]
    %s170 = scalar_lea.vmem [#allocation1], 48
    %v171 = vld.sshfl [vmem:[%s170] sm:$0xff pattern:$0x98100000]
    %vm172 = vcmask 1047556
    %v173 = vsel %vm172, %v171, %v169
    %174 = vrot.lane.b32.xlu0 %v173, 122
    %v175 = vpop.permute.xlu0 %174
    %vm176 = vcmask 23552
    %s177 = scalar_lea.vmem [#allocation0], 66
    %178 = vst.msk [vmem:[%s177] ss:$8 sm:$0xf] %vm176, %v175
    %s179 = scalar_lea.vmem [#allocation0], 66
    %180 = vst.msk [vmem:[%s179] ss:$8 sm:$0xf0] %vm176, %v175
    %s181 = scalar_lea.vmem [#allocation1], 64
    %v182 = vld.sshfl [vmem:[%s181] sm:$0xff pattern:$0x99999810]
    %s183 = scalar_lea.vmem [#allocation1], 80
    %v184 = vld.sshfl [vmem:[%s183] sm:$0xff pattern:$0x98100000]
    %vm185 = vcmask 1047556
    %v186 = vsel %vm185, %v184, %v182
    %187 = vrot.lane.b32.xlu0 %v186, 122
    %v188 = vpop.permute.xlu0 %187
    %vm189 = vcmask 23552
    %s190 = scalar_lea.vmem [#allocation0], 130
    %191 = vst.msk [vmem:[%s190] ss:$8 sm:$0xf] %vm189, %v188
    %s192 = scalar_lea.vmem [#allocation0], 130
    %193 = vst.msk [vmem:[%s192] ss:$8 sm:$0xf0] %vm189, %v188
    %v194 = vld.sshfl [vmem:[#allocation1] sm:$0xff pattern:$0x99999810]
    %s195 = scalar_lea.vmem [#allocation1], 16
    %v196 = vld.sshfl [vmem:[%s195] sm:$0xff pattern:$0x98100000]
    %vm197 = vcmask 1047556
    %v198 = vsel %vm197, %v196, %v194
    %199 = vrot.lane.b32.xlu0 %v198, 119
    %v200 = vpop.permute.xlu0 %199
    %vm201 = vcmask 23552
    %s202 = scalar_lea.vmem [#allocation0], 3
    %203 = vst.msk [vmem:[%s202] ss:$8 sm:$0xf] %vm201, %v200
    %s204 = scalar_lea.vmem [#allocation0], 3
    %205 = vst.msk [vmem:[%s204] ss:$8 sm:$0xf0] %vm201, %v200
    %s206 = scalar_lea.vmem [#allocation1], 32
    %v207 = vld.sshfl [vmem:[%s206] sm:$0xff pattern:$0x99999810]
    %s208 = scalar_lea.vmem [#allocation1], 48
    %v209 = vld.sshfl [vmem:[%s208] sm:$0xff pattern:$0x98100000]
    %vm210 = vcmask 1047556
    %v211 = vsel %vm210, %v209, %v207
    %212 = vrot.lane.b32.xlu0 %v211, 119
    %v213 = vpop.permute.xlu0 %212
    %vm214 = vcmask 23552
    %s215 = scalar_lea.vmem [#allocation0], 67
    %216 = vst.msk [vmem:[%s215] ss:$8 sm:$0xf] %vm214, %v213
    %s217 = scalar_lea.vmem [#allocation0], 67
    %218 = vst.msk [vmem:[%s217] ss:$8 sm:$0xf0] %vm214, %v213
    %s219 = scalar_lea.vmem [#allocation1], 64
    %v220 = vld.sshfl [vmem:[%s219] sm:$0xff pattern:$0x99999810]
    %s221 = scalar_lea.vmem [#allocation1], 80
    %v222 = vld.sshfl [vmem:[%s221] sm:$0xff pattern:$0x98100000]
    %vm223 = vcmask 1047556
    %v224 = vsel %vm223, %v222, %v220
    %225 = vrot.lane.b32.xlu0 %v224, 119
    %v226 = vpop.permute.xlu0 %225
    %vm227 = vcmask 23552
    %s228 = scalar_lea.vmem [#allocation0], 131
    %229 = vst.msk [vmem:[%s228] ss:$8 sm:$0xf] %vm227, %v226
    %s230 = scalar_lea.vmem [#allocation0], 131
    %231 = vst.msk [vmem:[%s230] ss:$8 sm:$0xf0] %vm227, %v226
    %s233 = sshllo.u32 0, 4
    %v235 = vld [vmem:[#allocation0] sm:%s233]
    %s236 = sshllo.u32 0, 4
    %237 = vst [vmem:[%s1] sm:%s236] %v235
    %s238 = scalar_lea.vmem [#allocation0], 8
    %v239 = vld [vmem:[%s238] sm:%s233]
    %s240 = sshllo.u32 0, 4
    %s241 = scalar_lea.vmem %s1, 4
    %242 = vst [vmem:[%s241] sm:%s240] %v239
    %s243 = scalar_lea.vmem [#allocation0], 16
    %v244 = vld [vmem:[%s243] sm:%s233]
    %s245 = sshllo.u32 0, 4
    %s246 = smul.addr 4, 2
    %s247 = scalar_lea.vmem %s1, %s246
    %248 = vst [vmem:[%s247] sm:%s245] %v244
    %s249 = scalar_lea.vmem [#allocation0], 24
    %v250 = vld [vmem:[%s249] sm:%s233]
    %s251 = sshllo.u32 0, 4
    %s252 = smul.addr 4, 3
    %s253 = scalar_lea.vmem %s1, %s252
    %254 = vst [vmem:[%s253] sm:%s251] %v250
    %s255 = scalar_lea.vmem [#allocation0], 32
    %v256 = vld [vmem:[%s255] sm:%s233]
    %s257 = sshllo.u32 0, 4
    %s258 = smul.addr 4, 4
    %s259 = scalar_lea.vmem %s1, %s258
    %260 = vst [vmem:[%s259] sm:%s257] %v256
    %s261 = scalar_lea.vmem [#allocation0], 40
    %v262 = vld [vmem:[%s261] sm:%s233]
    %s263 = sshllo.u32 0, 4
    %s264 = smul.addr 4, 5
    %s265 = scalar_lea.vmem %s1, %s264
    %266 = vst [vmem:[%s265] sm:%s263] %v262
    %s267 = scalar_lea.vmem [#allocation0], 48
    %v268 = vld [vmem:[%s267] sm:%s233]
    %s269 = sshllo.u32 0, 4
    %s270 = smul.addr 4, 6
    %s271 = scalar_lea.vmem %s1, %s270
    %272 = vst [vmem:[%s271] sm:%s269] %v268
    %s273 = scalar_lea.vmem [#allocation0], 56
    %v274 = vld [vmem:[%s273] sm:%s233]
    %s275 = sshllo.u32 0, 4
    %s276 = smul.addr 4, 7
    %s277 = scalar_lea.vmem %s1, %s276
    %278 = vst [vmem:[%s277] sm:%s275] %v274
    %s279 = scalar_lea.vmem [#allocation0], 64
    %v280 = vld [vmem:[%s279] sm:%s233]
    %s281 = sshllo.u32 0, 4
    %s282 = smul.addr 4, 8
    %s283 = scalar_lea.vmem %s1, %s282
    %284 = vst [vmem:[%s283] sm:%s281] %v280
    %s285 = scalar_lea.vmem [#allocation0], 72
    %v286 = vld [vmem:[%s285] sm:%s233]
    %s287 = sshllo.u32 0, 4
    %s288 = smul.addr 4, 9
    %s289 = scalar_lea.vmem %s1, %s288
    %290 = vst [vmem:[%s289] sm:%s287] %v286
    %s291 = scalar_lea.vmem [#allocation0], 80
    %v292 = vld [vmem:[%s291] sm:%s233]
    %s293 = sshllo.u32 0, 4
    %s294 = smul.addr 4, 10
    %s295 = scalar_lea.vmem %s1, %s294
    %296 = vst [vmem:[%s295] sm:%s293] %v292
    %s297 = scalar_lea.vmem [#allocation0], 88
    %v298 = vld [vmem:[%s297] sm:%s233]
    %s299 = sshllo.u32 0, 4
    %s300 = smul.addr 4, 11
    %s301 = scalar_lea.vmem %s1, %s300
    %302 = vst [vmem:[%s301] sm:%s299] %v298
    %s303 = scalar_lea.vmem [#allocation0], 96
    %v304 = vld [vmem:[%s303] sm:%s233]
    %s305 = sshllo.u32 0, 4
    %s306 = smul.addr 4, 12
    %s307 = scalar_lea.vmem %s1, %s306
    %308 = vst [vmem:[%s307] sm:%s305] %v304
    %s309 = scalar_lea.vmem [#allocation0], 104
    %v310 = vld [vmem:[%s309] sm:%s233]
    %s311 = sshllo.u32 0, 4
    %s312 = smul.addr 4, 13
    %s313 = scalar_lea.vmem %s1, %s312
    %314 = vst [vmem:[%s313] sm:%s311] %v310
    %s315 = scalar_lea.vmem [#allocation0], 112
    %v316 = vld [vmem:[%s315] sm:%s233]
    %s317 = sshllo.u32 0, 4
    %s318 = smul.addr 4, 14
    %s319 = scalar_lea.vmem %s1, %s318
    %320 = vst [vmem:[%s319] sm:%s317] %v316
    %s321 = scalar_lea.vmem [#allocation0], 120
    %v322 = vld [vmem:[%s321] sm:%s233]
    %s323 = sshllo.u32 0, 4
    %s324 = smul.addr 4, 15
    %s325 = scalar_lea.vmem %s1, %s324
    %326 = vst [vmem:[%s325] sm:%s323] %v322
    %s327 = scalar_lea.vmem [#allocation0], 128
    %v328 = vld [vmem:[%s327] sm:%s233]
    %s329 = sshllo.u32 0, 4
    %s330 = smul.addr 4, 16
    %s331 = scalar_lea.vmem %s1, %s330
    %332 = vst [vmem:[%s331] sm:%s329] %v328
    %s333 = scalar_lea.vmem [#allocation0], 136
    %v334 = vld [vmem:[%s333] sm:%s233]
    %s335 = sshllo.u32 0, 4
    %s336 = smul.addr 4, 17
    %s337 = scalar_lea.vmem %s1, %s336
    %338 = vst [vmem:[%s337] sm:%s335] %v334
    %s339 = scalar_lea.vmem [#allocation0], 144
    %v340 = vld [vmem:[%s339] sm:%s233]
    %s341 = sshllo.u32 0, 4
    %s342 = smul.addr 4, 18
    %s343 = scalar_lea.vmem %s1, %s342
    %344 = vst [vmem:[%s343] sm:%s341] %v340
    %s345 = scalar_lea.vmem [#allocation0], 152
    %v346 = vld [vmem:[%s345] sm:%s233]
    %s347 = sshllo.u32 0, 4
    %s348 = smul.addr 4, 19
    %s349 = scalar_lea.vmem %s1, %s348
    %350 = vst [vmem:[%s349] sm:%s347] %v346
    %s351 = scalar_lea.vmem [#allocation0], 160
    %v352 = vld [vmem:[%s351] sm:%s233]
    %s353 = sshllo.u32 0, 4
    %s354 = smul.addr 4, 20
    %s355 = scalar_lea.vmem %s1, %s354
    %356 = vst [vmem:[%s355] sm:%s353] %v352
    %s357 = scalar_lea.vmem [#allocation0], 168
    %v358 = vld [vmem:[%s357] sm:%s233]
    %s359 = sshllo.u32 0, 4
    %s360 = smul.addr 4, 21
    %s361 = scalar_lea.vmem %s1, %s360
    %362 = vst [vmem:[%s361] sm:%s359] %v358
    %s363 = scalar_lea.vmem [#allocation0], 176
    %v364 = vld [vmem:[%s363] sm:%s233]
    %s365 = sshllo.u32 0, 4
    %s366 = smul.addr 4, 22
    %s367 = scalar_lea.vmem %s1, %s366
    %368 = vst [vmem:[%s367] sm:%s365] %v364
    %s369 = scalar_lea.vmem [#allocation0], 184
    %v370 = vld [vmem:[%s369] sm:%s233]
    %s371 = sshllo.u32 0, 4
    %s372 = smul.addr 4, 23
    %s373 = scalar_lea.vmem %s1, %s372
    %374 = vst [vmem:[%s373] sm:%s371] %v370

// kernel: tile.68
$region0: #{tile.68}
  #allocation0 [shape = 's32[1]{0}', space=sflag, size = 0x4, scoped, tag = 'scoped memory for tile.68']
  %s0 = inlined_call_operand.vmem [shape: f32[8], index: 0, kind: input, shape index: {}]
  %s1 = inlined_call_operand.vmem [shape: f32[9,8], index: 1, kind: output, shape index: {}]
  // Predicated region
  $region2: #{tile.68} parent=0 // pred_check
    _
  $region3: #{tile.68} parent=0 // pred_check_branch
    %3 = sbr.rel (0) target = $region5
  $region4: #{tile.68} parent=0 // pred_region
    _
  $region5: #{tile.68} parent=0 // pred_fallthru
    _
  %v4 = vld [vmem:[%s0] ss:$0 sm:$0xff]
  %5 = vst [vmem:[%s1] sm:$0xff] %v4
  %s6 = scalar_lea.vmem %s1, 8
  %7 = vst [vmem:[%s6] sm:$0xff] %v4

// kernel: tile.69
$region0: #{tile.69}
  %s0 = inlined_call_operand.vmem [shape: f32[9,8], index: 0, kind: input, shape index: {}]
  %s1 = inlined_call_operand.vmem [shape: f32[72], index: 1, kind: output, shape index: {}]
  $region1: #{tile.69} parent=0
    #allocation0 [shape = 'u8[4096]{0}', space=vmem, size = 0x1000, scoped, tag = 'scoped mem for output reshape']
    %v2 = vld [vmem:[%s0] sm:$0x1]
    %vm3 = vcmask 64512
    %4 = vst.msk [vmem:[#allocation0] sm:$0x1] %vm3, %v2
    %s5 = scalar_lea.vmem %s0, 8
    %v6 = vld [vmem:[%s5] sm:$0x1]
    %7 = vrot.lane.b32.xlu0 %v6, 64
    %v8 = vpop.permute.xlu0 %7
    %vm9 = vcmask 589312
    %10 = vst.msk [vmem:[#allocation0] sm:$0x1] %vm9, %v8
    %s11 = scalar_lea.vmem %s0, 7
    %v12 = vld [vmem:[%s11] sm:$0x1]
    %13 = vrot.lane.b32.xlu0 %v12, 56
    %v14 = vpop.permute.xlu0 %13
    %vm15 = vcmask 523712
    %16 = vst.msk [vmem:[#allocation0] sm:$0x1] %vm15, %v14
    %s17 = scalar_lea.vmem %s0, 6
    %v18 = vld [vmem:[%s17] sm:$0x1]
    %19 = vrot.lane.b32.xlu0 %v18, 48
    %v20 = vpop.permute.xlu0 %19
    %vm21 = vcmask 458112
    %22 = vst.msk [vmem:[#allocation0] sm:$0x1] %vm21, %v20
    %s23 = scalar_lea.vmem %s0, 5
    %v24 = vld [vmem:[%s23] sm:$0x1]
    %25 = vrot.lane.b32.xlu0 %v24, 40
    %v26 = vpop.permute.xlu0 %25
    %vm27 = vcmask 392512
    %28 = vst.msk [vmem:[#allocation0] sm:$0x1] %vm27, %v26
    %s29 = scalar_lea.vmem %s0, 4
    %v30 = vld [vmem:[%s29] sm:$0x1]
    %31 = vrot.lane.b32.xlu0 %v30, 32
    %v32 = vpop.permute.xlu0 %31
    %vm33 = vcmask 326912
    %34 = vst.msk [vmem:[#allocation0] sm:$0x1] %vm33, %v32
    %s35 = scalar_lea.vmem %s0, 3
    %v36 = vld [vmem:[%s35] sm:$0x1]
    %37 = vrot.lane.b32.xlu0 %v36, 24
    %v38 = vpop.permute.xlu0 %37
    %vm39 = vcmask 261312
    %40 = vst.msk [vmem:[#allocation0] sm:$0x1] %vm39, %v38
    %s41 = scalar_lea.vmem %s0, 2
    %v42 = vld [vmem:[%s41] sm:$0x1]
    %43 = vrot.lane.b32.xlu0 %v42, 16
    %v44 = vpop.permute.xlu0 %43
    %vm45 = vcmask 195712
    %46 = vst.msk [vmem:[#allocation0] sm:$0x1] %vm45, %v44
    %s47 = scalar_lea.vmem %s0, 1
    %v48 = vld [vmem:[%s47] sm:$0x1]
    %49 = vrot.lane.b32.xlu0 %v48, 8
    %v50 = vpop.permute.xlu0 %49
    %vm51 = vcmask 130112
    %52 = vst.msk [vmem:[#allocation0] sm:$0x1] %vm51, %v50
    %s54 = sshllo.u32 0, 1
    %v56 = vld [vmem:[#allocation0] sm:%s54]
    %s57 = sshllo.u32 0, 1
    %58 = vst [vmem:[%s1] sm:%s57] %v56

// kernel: sparse_residual_units.6
$region0: #{sparse_residual_units.6}
  #allocation0 [shape = 'u32[]', space=smem, size = 0x4, offset = 0x4, fixed_abs, tag = 'smem constant byte address 0x4 - core index']
  #allocation1 [shape = 'u32[144,128]{1,0:T(1,128)}', space=vmem, size = 0x12000, scoped, tag = 'internal scratch']
  #allocation2 [shape = 's32[1]{0}', space=sflag, size = 0x4, scoped, tag = 'scoped memory for sparse_residual_units.6']
  #allocation3 [shape = 'u8[512]{0}', space=smem, size = 0x200, scoped, tag = 'prefetched SMEM operand 0']
  %s0 = inlined_call_operand.vmem [shape: s32[2], index: 0, kind: input, shape index: {}]
  %s1 = inlined_call_operand.vmem [shape: f32[32,128], index: 1, kind: input, shape index: {}]
  %s2 = inlined_call_operand.vmem [shape: bf16[128,128], index: 2, kind: input, shape index: {}]
  %s3 = inlined_call_operand.vmem [shape: f32[1,128], index: 3, kind: input, shape index: {}]
  %s4 = inlined_call_operand.vmem [shape: bf16[32,128], index: 4, kind: output, shape index: {0}]
  %s5 = inlined_call_operand.vmem [shape: f32[16,256], index: 5, kind: output, shape index: {1}]
  %6 = xla_tuple %s4, %s5
  %s7 = sld [smem:[#allocation0]]
  $region53: #{sparse_residual_units.6} parent=0
    _
  %s9 = ssub.s32 1, %s7
  %s10 = scalar_select 0, %s9, %s7
  %s11 = sshll.u32 %s0, 4
  %s12 = int_to_ptr.vmem [resolvable:$true] %s11
  %14 = dma.vmem_to_smem %s12, 16, [#allocation3], [#allocation2]
  %15 = dma.done [#allocation2], 16
  %16 = sfence
  loop: start=0, step=1, limit=4
  $region2: #{sparse_residual_units.6} parent=0 // loop_pre_header
    _
  $region3: #{sparse_residual_units.6} parent=0 // loop_header
    %s18 = sphi 0, %s22
    %p19 = scmp.ge.s32.totalorder %s18, 4
    %s36 = sphi 0, %s38
    %s39 = sphi 0, %s36
    %s40 = sphi 0, %s39
    %s56 = sphi 0, %s40
    %s60 = sphi 0, %s60
    %s62 = sphi 0, %s60
    %s63 = sphi 0, %s62
    %s77 = sphi 0, %s63
    %s81 = sphi 0, %s81
    %s83 = sphi 0, %s81
    %s84 = sphi 0, %s83
    %s98 = sphi 0, %s84
    %s112 = sphi 0, %s114
    %s115 = sphi 0, %s112
    %s116 = sphi 0, %s115
    %s132 = sphi 0, %s116
    %s138 = sphi 0, %s140
    %s141 = sphi 0, %s138
    %s142 = sphi 0, %s141
    %s158 = sphi 0, %s142
  $region4: #{sparse_residual_units.6} parent=0 // loop_header_branch
    %21 = sbr.rel (%p19) target = $region8
  $region5: #{sparse_residual_units.6} parent=0 // loop_body
    %s23 = ssub.s32 %s18, 1
    %s24 = ssub.s32 %s18, 2
    %s25 = sadd.s32 %s18, 1
    %s26 = sld [smem:[#allocation3]]
    %s27 = ssub.s32 %s26, 1
    %p28 = scmp.lt.s32.totalorder %s18, %s27
    %s29 = scalar_select %p28, %s18, %s27
    %s30 = sld [smem:[#allocation3]]
    %s31 = ssub.s32 %s30, 1
    %p32 = scmp.lt.s32.totalorder %s25, %s31
    %s33 = scalar_select %p32, %s25, %s31
    %s34 = ssub.s32 %s29, %s33
    %p35 = scmp.eq.s32.totalorder %s34, 0
    %s37 = sadd.s32 %s36, 1
    %s38 = scalar_select %p35, %s36, %s37
    %p41 = pneg %p35
    %p42 = scmp.eq.s32.totalorder %s18, 1
    %p43 = por %p41, %p42
    %p44 = scmp.ne.s32.totalorder %s36, %s39
    %p45 = scmp.eq.s32.totalorder %s18, 0
    %p46 = por %p44, %p45
    %p47 = scmp.ne.s32.totalorder %s36, %s39
    %p48 = scmp.eq.s32.totalorder %s23, 1
    %p49 = por %p47, %p48
    %p50 = scmp.ne.s32.totalorder %s39, %s40
    %p51 = scmp.eq.s32.totalorder %s23, 0
    %p52 = por %p50, %p51
    %p53 = scmp.ne.s32.totalorder %s39, %s40
    %p54 = scmp.eq.s32.totalorder %s24, 1
    %p55 = por %p53, %p54
    %p57 = scmp.ne.s32.totalorder %s40, %s56
    %p58 = scmp.eq.s32.totalorder %s24, 0
    %p59 = por %p57, %p58
    %s61 = sadd.s32 %s60, 1
    %p64 = scmp.eq.s32.totalorder %s18, 1
    %p65 = scmp.ne.s32.totalorder %s60, %s62
    %p66 = scmp.eq.s32.totalorder %s18, 0
    %p67 = por %p65, %p66
    %p68 = scmp.ne.s32.totalorder %s60, %s62
    %p69 = scmp.eq.s32.totalorder %s23, 1
    %p70 = por %p68, %p69
    %p71 = scmp.ne.s32.totalorder %s62, %s63
    %p72 = scmp.eq.s32.totalorder %s23, 0
    %p73 = por %p71, %p72
    %p74 = scmp.ne.s32.totalorder %s62, %s63
    %p75 = scmp.eq.s32.totalorder %s24, 1
    %p76 = por %p74, %p75
    %p78 = scmp.ne.s32.totalorder %s63, %s77
    %p79 = scmp.eq.s32.totalorder %s24, 0
    %p80 = por %p78, %p79
    %s82 = sadd.s32 %s81, 1
    %p85 = scmp.eq.s32.totalorder %s18, 1
    %p86 = scmp.ne.s32.totalorder %s81, %s83
    %p87 = scmp.eq.s32.totalorder %s18, 0
    %p88 = por %p86, %p87
    %p89 = scmp.ne.s32.totalorder %s81, %s83
    %p90 = scmp.eq.s32.totalorder %s23, 1
    %p91 = por %p89, %p90
    %p92 = scmp.ne.s32.totalorder %s83, %s84
    %p93 = scmp.eq.s32.totalorder %s23, 0
    %p94 = por %p92, %p93
    %p95 = scmp.ne.s32.totalorder %s83, %s84
    %p96 = scmp.eq.s32.totalorder %s24, 1
    %p97 = por %p95, %p96
    %p99 = scmp.ne.s32.totalorder %s84, %s98
    %p100 = scmp.eq.s32.totalorder %s24, 0
    %p101 = por %p99, %p100
    %s102 = sld [smem:[#allocation3]]
    %s103 = ssub.s32 %s102, 1
    %p104 = scmp.lt.s32.totalorder %s18, %s103
    %s105 = scalar_select %p104, %s18, %s103
    %s106 = sld [smem:[#allocation3]]
    %s107 = ssub.s32 %s106, 1
    %p108 = scmp.lt.s32.totalorder %s25, %s107
    %s109 = scalar_select %p108, %s25, %s107
    %s110 = ssub.s32 %s105, %s109
    %p111 = scmp.eq.s32.totalorder %s110, 0
    %s113 = sadd.s32 %s112, 1
    %s114 = scalar_select %p111, %s112, %s113
    %p117 = pneg %p111
    %p118 = scmp.eq.s32.totalorder %s18, 1
    %p119 = por %p117, %p118
    %p120 = scmp.ne.s32.totalorder %s112, %s115
    %p121 = scmp.eq.s32.totalorder %s18, 0
    %p122 = por %p120, %p121
    %p123 = scmp.ne.s32.totalorder %s112, %s115
    %p124 = scmp.eq.s32.totalorder %s23, 1
    %p125 = por %p123, %p124
    %p126 = scmp.ne.s32.totalorder %s115, %s116
    %p127 = scmp.eq.s32.totalorder %s23, 0
    %p128 = por %p126, %p127
    %p129 = scmp.ne.s32.totalorder %s115, %s116
    %p130 = scmp.eq.s32.totalorder %s24, 1
    %p131 = por %p129, %p130
    %p133 = scmp.ne.s32.totalorder %s116, %s132
    %p134 = scmp.eq.s32.totalorder %s24, 0
    %p135 = por %p133, %p134
    %s136 = ssub.s32 %s18, %s25
    %p137 = scmp.eq.s32.totalorder %s136, 0
    %s139 = sadd.s32 %s138, 1
    %s140 = scalar_select %p137, %s138, %s139
    %p143 = pneg %p137
    %p144 = scmp.eq.s32.totalorder %s18, 1
    %p145 = por %p143, %p144
    %p146 = scmp.ne.s32.totalorder %s138, %s141
    %p147 = scmp.eq.s32.totalorder %s18, 0
    %p148 = por %p146, %p147
    %p149 = scmp.ne.s32.totalorder %s138, %s141
    %p150 = scmp.eq.s32.totalorder %s23, 1
    %p151 = por %p149, %p150
    %p152 = scmp.ne.s32.totalorder %s141, %s142
    %p153 = scmp.eq.s32.totalorder %s23, 0
    %p154 = por %p152, %p153
    %p155 = scmp.ne.s32.totalorder %s141, %s142
    %p156 = scmp.eq.s32.totalorder %s24, 1
    %p157 = por %p155, %p156
    %p159 = scmp.ne.s32.totalorder %s142, %s158
    %p160 = scmp.eq.s32.totalorder %s24, 0
    %p161 = por %p159, %p160
    %p162 = scmp.le.s32.totalorder 1, %s18
    %p163 = scmp.lt.s32.totalorder %s18, 3
    %p164 = pnand %p162, %p163
    %p165 = pneg %p164
    // Predicated region
    $region9: #{sparse_residual_units.6} parent=5 // pred_check
      _
    $region10: #{sparse_residual_units.6} parent=5 // pred_check_branch
      %167 = sbr.rel (%p164) target = $region12
    $region11: #{sparse_residual_units.6} parent=5 // pred_region
      %s168 = ssub.s32 %s18, 1
      // Predicated region
      $region13: #{sparse_residual_units.6} parent=11 // pred_check
        %p169 = pneg %p73
      $region14: #{sparse_residual_units.6} parent=11 // pred_check_branch
        %171 = sbr.rel (%p169) target = $region16
      $region15: #{sparse_residual_units.6} parent=11 // pred_region
        _
      $region16: #{sparse_residual_units.6} parent=11 // pred_fallthru
        _
      // Predicated region
      $region17: #{sparse_residual_units.6} parent=11 // pred_check
        %p172 = pneg %p94
      $region18: #{sparse_residual_units.6} parent=11 // pred_check_branch
        %174 = sbr.rel (%p172) target = $region20
      $region19: #{sparse_residual_units.6} parent=11 // pred_region
        _
      $region20: #{sparse_residual_units.6} parent=11 // pred_fallthru
        _
    $region12: #{sparse_residual_units.6} parent=5 // pred_fallthru
      _
    %p175 = scmp.lt.s32.totalorder %s18, 2
    // Predicated region
    $region21: #{sparse_residual_units.6} parent=5 // pred_check
      %p176 = pneg %p175
    $region22: #{sparse_residual_units.6} parent=5 // pred_check_branch
      %178 = sbr.rel (%p176) target = $region24
    $region23: #{sparse_residual_units.6} parent=5 // pred_region
      // Predicated region
      $region25: #{sparse_residual_units.6} parent=23 // pred_check
        %p179 = pneg %p46
      $region26: #{sparse_residual_units.6} parent=23 // pred_check_branch
        %181 = sbr.rel (%p179) target = $region28
      $region27: #{sparse_residual_units.6} parent=23 // pred_region
        %s182 = sld [smem:[#allocation3]]
        %s183 = ssub.s32 %s182, 1
        %p184 = scmp.lt.s32.totalorder %s18, %s183
        %s185 = scalar_select %p184, %s18, %s183
        %s186 = smul.u32 2, %s185
        %p187 = scmp.lt.s32.totalorder %s186, 3
        %s188 = scalar_select %p187, %s186, 3
        %s189 = smul.addr %s188, 8
        %s190 = scalar_lea.vmem %s1, %s189
        %s191 = sld [smem:[#allocation3]]
        %s192 = ssub.s32 %s191, 1
        %p193 = scmp.lt.s32.totalorder %s18, %s192
        %s194 = scalar_select %p193, %s18, %s192
        %s195 = smul.u32 2, %s194
      $region28: #{sparse_residual_units.6} parent=23 // pred_fallthru
        _
    $region24: #{sparse_residual_units.6} parent=5 // pred_fallthru
      _
    %p196 = scmp.le.s32.totalorder 1, %s18
    %p197 = scmp.lt.s32.totalorder %s18, 3
    %p198 = pnand %p196, %p197
    %p199 = pneg %p198
    // Predicated region
    $region29: #{sparse_residual_units.6} parent=5 // pred_check
      _
    $region30: #{sparse_residual_units.6} parent=5 // pred_check_branch
      %201 = sbr.rel (%p198) target = $region32
    $region31: #{sparse_residual_units.6} parent=5 // pred_region
      %s202 = ssub.s32 %s18, 1
      %s203 = sld [smem:[#allocation3]]
      %s204 = ssub.s32 %s203, 1
      %p205 = scmp.lt.s32.totalorder %s23, %s204
      %s206 = scalar_select %p205, %s23, %s204
      %s207 = smul.u32 2, %s206
      %p208 = scmp.lt.s32.totalorder %s207, 3
      %s209 = scalar_select %p208, %s207, 3
      %s210 = smul.addr %s209, 8
      %s211 = scalar_lea.vmem %s1, %s210
      %p212 = pneg %p52
      %p213 = pneg %p49
      %p214 = pneg %p73
      %p215 = pneg %p70
      %p216 = pneg %p94
      %p217 = pneg %p91
      %p218 = pneg %p128
      %p219 = pneg %p125
      %s220 = sld [smem:[#allocation3]]
      %s221 = ssub.s32 %s220, 1
      %p222 = scmp.lt.s32.totalorder %s23, %s221
      %s223 = scalar_select %p222, %s23, %s221
      %s224 = smul.u32 2, %s223
      %p225 = scmp.lt.s32.totalorder %s224, 3
      %s226 = scalar_select %p225, %s224, 3
      %s227 = smul.addr %s226, 4
      %s228 = scalar_lea.vmem %s4, %s227
      %p229 = pneg %p154
      %p230 = pneg %p151
      %p231 = scmp.lt.s32.totalorder %s23, 1
      %s232 = scalar_select %p231, %s23, 1
      %s233 = smul.addr %s232, 2
      %s234 = smul.addr %s233, 8
      %s235 = scalar_lea.vmem %s5, %s234
      %s236 = sld [smem:[#allocation3]]
      %s237 = ssub.s32 %s236, 1
      %p238 = scmp.lt.s32.totalorder %s23, %s237
      %s239 = scalar_select %p238, %s23, %s237
      %s240 = smul.u32 2, %s239
      %p241 = scmp.lt.s32.totalorder %s240, 3
      %s242 = scalar_select %p241, %s240, 3
      %s243 = smul.addr %s242, 8
      %s244 = scalar_lea.vmem %s1, %s243
      %s245 = sld [smem:[#allocation3]]
      %s246 = ssub.s32 %s245, 1
      %p247 = scmp.lt.s32.totalorder %s23, %s246
      %s248 = scalar_select %p247, %s23, %s246
      %s249 = smul.u32 2, %s248
      %s250 = sld [smem:[#allocation3]]
      %s251 = ssub.s32 %s250, 1
      %p252 = scmp.lt.s32.totalorder %s23, %s251
      %s253 = scalar_select %p252, %s23, %s251
      %s254 = smul.u32 2, %s253
      %p255 = scmp.lt.s32.totalorder %s254, 3
      %s256 = scalar_select %p255, %s254, 3
      %s257 = smul.addr %s256, 4
      %s258 = scalar_lea.vmem %s4, %s257
      %s259 = sld [smem:[#allocation3]]
      %s260 = ssub.s32 %s259, 1
      %p261 = scmp.lt.s32.totalorder %s23, %s260
      %s262 = scalar_select %p261, %s23, %s260
      %s263 = smul.u32 2, %s262
      %p264 = scmp.lt.s32.totalorder %s23, 1
      %s265 = scalar_select %p264, %s23, 1
      %s266 = smul.addr %s265, 2
      %s267 = smul.addr %s266, 8
      %s268 = scalar_lea.vmem %s5, %s267
      %v270 = vld [vmem:[%s244] sm:$0xff]
      %v271 = vld [vmem:[%s244 + $0x8] sm:$0xff]
      %v272 = vpack.c.bf16 %v271, %v270
      %v273 = vld [vmem:[%s2] sm:$0xf]
      %v274 = vld [vmem:[%s2 + $0x4] sm:$0xf]
      %v275 = vld [vmem:[%s2 + $0x8] sm:$0xf]
      %v276 = vld [vmem:[%s2 + $0xc] sm:$0xf]
      %v277 = vld [vmem:[%s2 + $0x10] sm:$0xf]
      %v278 = vld [vmem:[%s2 + $0x14] sm:$0xf]
      %v279 = vld [vmem:[%s2 + $0x18] sm:$0xf]
      %v280 = vld [vmem:[%s2 + $0x1c] sm:$0xf]
      %v281 = vld [vmem:[%s2 + $0x20] sm:$0xf]
      %v282 = vld [vmem:[%s2 + $0x24] sm:$0xf]
      %v283 = vld [vmem:[%s2 + $0x28] sm:$0xf]
      %v284 = vld [vmem:[%s2 + $0x2c] sm:$0xf]
      %v285 = vld [vmem:[%s2 + $0x30] sm:$0xf]
      %v286 = vld [vmem:[%s2 + $0x34] sm:$0xf]
      %v287 = vld [vmem:[%s2 + $0x38] sm:$0xf]
      %v288 = vld [vmem:[%s2 + $0x3c] sm:$0xf]
      %v289 = vld [vmem:[%s3] sm:$0x1]
      %v291 = vlaneseq
      %v292 = vshrl.u32 %v291, 7
      %v293 = vsub.s32 0, %v292
      %v294 = vrot.slane %v289, %v293
      %v312 = vunpack.c.l.b16 %v273
      %v313 = vunpack.c.l.b16 %v274
      %v314 = vunpack.c.l.b16 %v275
      %v315 = vunpack.c.l.b16 %v276
      %v316 = vunpack.c.l.b16 %v277
      %v317 = vunpack.c.l.b16 %v278
      %v318 = vunpack.c.l.b16 %v279
      %v319 = vunpack.c.l.b16 %v280
      %v320 = vunpack.c.l.b16 %v281
      %v321 = vunpack.c.l.b16 %v282
      %v322 = vunpack.c.l.b16 %v283
      %v323 = vunpack.c.l.b16 %v284
      %v324 = vunpack.c.l.b16 %v285
      %v325 = vunpack.c.l.b16 %v286
      %v326 = vunpack.c.l.b16 %v287
      %v327 = vunpack.c.l.b16 %v288
      %v328 = vpack.c.b16 %v313, %v312
      %v329 = vpack.c.b16 %v315, %v314
      %v330 = vpack.c.b16 %v317, %v316
      %v331 = vpack.c.b16 %v319, %v318
      %v332 = vpack.c.b16 %v321, %v320
      %v333 = vpack.c.b16 %v323, %v322
      %v334 = vpack.c.b16 %v325, %v324
      %v335 = vpack.c.b16 %v327, %v326
      %344 = vmatprep.subr.bf16.mxu0 0
      %345 = vmatpush1.bf16.msra.mxu0 %v328
      %346 = vmatprep.subr.bf16.mxu0 0
      %347 = vmatpush1.bf16.msra.mxu0 %v329
      %348 = vmatprep.subr.bf16.mxu0 0
      %349 = vmatpush1.bf16.msra.mxu0 %v330
      %350 = vmatprep.subr.bf16.mxu0 0
      %351 = vmatpush1.bf16.msra.mxu0 %v331
      %352 = vmatprep.subr.bf16.mxu0 0
      %353 = vmatpush1.bf16.msra.mxu0 %v332
      %354 = vmatprep.subr.bf16.mxu0 0
      %355 = vmatpush1.bf16.msra.mxu0 %v333
      %356 = vmatprep.subr.bf16.mxu0 0
      %357 = vmatpush1.bf16.msra.mxu0 %v334
      %358 = vmatprep.subr.bf16.mxu0 0
      %359 = vmatpush1.bf16.msra.mxu0 %v335
      %360 = vmatprep.subr.bf16.mxu0 0
      %361 = vmatpush1.bf16.msra.mxu0 0
      %362 = vmatprep.subr.bf16.mxu0 0
      %363 = vmatpush1.bf16.msra.mxu0 0
      %364 = vmatprep.subr.bf16.mxu0 0
      %365 = vmatpush1.bf16.msra.mxu0 0
      %366 = vmatprep.subr.bf16.mxu0 0
      %367 = vmatpush1.bf16.msra.mxu0 0
      %368 = vmatprep.subr.bf16.mxu0 0
      %369 = vmatpush1.bf16.msra.mxu0 0
      %370 = vmatprep.subr.bf16.mxu0 0
      %371 = vmatpush1.bf16.msra.mxu0 0
      %372 = vmatprep.subr.bf16.mxu0 0
      %373 = vmatpush1.bf16.msra.mxu0 0
      %374 = vmatprep.subr.bf16.mxu0 0
      %375 = vmatpush1.bf16.msra.mxu0 0
      %376 = vmatprep.mubr.bf16.mxu0 0
      %377 = vmatmul.mubr.bf16.gmra.mrb[0].mxu0 %v272
      %v378 = vpop.f32.mrb[0].mxu0
      %v379 = vadd.f32 %v294, %v378
      %v380 = vpop.f32.mrb[0].mxu0
      %v381 = vpop.f32.mrb[0].mxu0
      %v382 = vadd.f32 %v294, %v381
      %v383 = vpop.f32.mrb[0].mxu0
      %384 = vdwg.mxu0
      %v385 = vpack.c.bf16 %v382, %v379
      %v387 = vunpack.c.l.b16 %v385
      %v388 = vunpack.c.h.b16 %v385
      %v389 = vpack.c.b16 %v387, %v387
      %v390 = vpack.c.b16 %v388, %v388
      %393 = vst [vmem:[%s258] sm:$0xf] %v389
      %394 = vst [vmem:[%s258 + $0x4] sm:$0xf] %v390
      %s395 = smul.u32 %s23, 16
      %v396 = vlaneseq
      %v397 = vshrl.u32 %v396, 7
      %v398 = vadd.s32 %v397, 8
      %v399 = vstv %s395
      %v400 = vadd.s32 %v399, %v397
      %v401 = vadd.s32 %v399, %v398
      %s402 = sld [smem:[#allocation3 + $0x1]]
      %v403 = vstv %s402
      %vm404 = vcmp.lt.s32.totalorder %v400, %v403
      %vm405 = vcmp.lt.s32.totalorder %v401, %v403
      %v406 = vsel %vm404, 1, 0
      %v407 = vsel %vm405, 1, 0
      %v408 = vcvt.s32.f32 %v406
      %v409 = vcvt.s32.f32 %v407
      %v410 = vld [vmem:[%s3] sm:$0x1]
      %v412 = vlaneseq
      %v413 = vshrl.u32 %v412, 7
      %v414 = vsub.s32 0, %v413
      %v415 = vrot.slane %v410, %v414
      %v417 = vsub.f32 %v379, %v415
      %v418 = vsub.f32 %v382, %v415
      %v419 = vmul.f32 %v408, %v417
      %v420 = vmul.f32 %v409, %v418
      %v421 = vadd.f32 %v419, %v420
      %v422 = vrot.slane %v421, 4
      %v423 = vadd.f32 %v421, %v422
      %v424 = vrot.slane %v423, 2
      %v425 = vadd.f32 %v423, %v424
      %v426 = vrot.slane %v425, 1
      %v427 = vadd.f32 %v425, %v426
      %428 = vst [vmem:[%s268] sm:$0xff] %v427
      %v429 = vmul.f32 %v419, %v417
      %v430 = vmul.f32 %v420, %v418
      %v431 = vadd.f32 %v429, %v430
      %v432 = vrot.slane %v431, 4
      %v433 = vadd.f32 %v431, %v432
      %v434 = vrot.slane %v433, 2
      %v435 = vadd.f32 %v433, %v434
      %v436 = vrot.slane %v435, 1
      %v437 = vadd.f32 %v435, %v436
      %438 = vst [vmem:[%s268 + $0x8] sm:$0xff] %v437
      %s439 = sld [smem:[#allocation3]]
      %s440 = ssub.s32 %s439, 1
      %p441 = scmp.lt.s32.totalorder %s23, %s440
      %s442 = scalar_select %p441, %s23, %s440
      %s443 = smul.u32 2, %s442
      %p444 = scmp.lt.s32.totalorder %s443, 3
      %s445 = scalar_select %p444, %s443, 3
      %s446 = smul.addr %s445, 4
      %s447 = scalar_lea.vmem %s4, %s446
      %p448 = scmp.lt.s32.totalorder %s23, 1
      %s449 = scalar_select %p448, %s23, 1
      %s450 = smul.addr %s449, 2
      %s451 = smul.addr %s450, 8
      %s452 = scalar_lea.vmem %s5, %s451
      // Predicated region
      $region33: #{sparse_residual_units.6} parent=31 // pred_check
        %p453 = pneg %p125
      $region34: #{sparse_residual_units.6} parent=31 // pred_check_branch
        %455 = sbr.rel (%p453) target = $region36
      $region35: #{sparse_residual_units.6} parent=31 // pred_region
        %s456 = sld [smem:[#allocation3]]
        %s457 = ssub.s32 %s456, 1
        %p458 = scmp.lt.s32.totalorder %s23, %s457
        %s459 = scalar_select %p458, %s23, %s457
        %s460 = smul.u32 2, %s459
      $region36: #{sparse_residual_units.6} parent=31 // pred_fallthru
        _
      // Predicated region
      $region37: #{sparse_residual_units.6} parent=31 // pred_check
        %p461 = pneg %p151
      $region38: #{sparse_residual_units.6} parent=31 // pred_check_branch
        %463 = sbr.rel (%p461) target = $region40
      $region39: #{sparse_residual_units.6} parent=31 // pred_region
        _
      $region40: #{sparse_residual_units.6} parent=31 // pred_fallthru
        _
    $region32: #{sparse_residual_units.6} parent=5 // pred_fallthru
      _
    %p464 = scmp.le.s32.totalorder 2, %s18
    // Predicated region
    $region41: #{sparse_residual_units.6} parent=5 // pred_check
      %p465 = pneg %p464
    $region42: #{sparse_residual_units.6} parent=5 // pred_check_branch
      %467 = sbr.rel (%p465) target = $region44
    $region43: #{sparse_residual_units.6} parent=5 // pred_region
      %s468 = ssub.s32 %s18, 2
      // Predicated region
      $region45: #{sparse_residual_units.6} parent=43 // pred_check
        %p469 = pneg %p131
      $region46: #{sparse_residual_units.6} parent=43 // pred_check_branch
        %471 = sbr.rel (%p469) target = $region48
      $region47: #{sparse_residual_units.6} parent=43 // pred_region
        %s472 = sld [smem:[#allocation3]]
        %s473 = ssub.s32 %s472, 1
        %p474 = scmp.lt.s32.totalorder %s24, %s473
        %s475 = scalar_select %p474, %s24, %s473
        %s476 = smul.u32 2, %s475
        %p477 = scmp.lt.s32.totalorder %s476, 3
        %s478 = scalar_select %p477, %s476, 3
        %s479 = smul.addr %s478, 4
        %s480 = scalar_lea.vmem %s4, %s479
      $region48: #{sparse_residual_units.6} parent=43 // pred_fallthru
        _
      // Predicated region
      $region49: #{sparse_residual_units.6} parent=43 // pred_check
        %p481 = pneg %p157
      $region50: #{sparse_residual_units.6} parent=43 // pred_check_branch
        %483 = sbr.rel (%p481) target = $region52
      $region51: #{sparse_residual_units.6} parent=43 // pred_region
        %p484 = scmp.lt.s32.totalorder %s24, 1
        %s485 = scalar_select %p484, %s24, 1
        %s486 = smul.addr %s485, 2
        %s487 = smul.addr %s486, 8
        %s488 = scalar_lea.vmem %s5, %s487
      $region52: #{sparse_residual_units.6} parent=43 // pred_fallthru
        _
    $region44: #{sparse_residual_units.6} parent=5 // pred_fallthru
      _
  $region6: #{sparse_residual_units.6} parent=0 // loop_footer
    %s22 = sadd.s32 1, %s18
  $region7: #{sparse_residual_units.6} parent=0 // loop_footer_branch
    %17 = sbr.rel target = $region3
  $region8: #{sparse_residual_units.6} parent=0 // loop_exit
    _

// kernel: sparse_residual_units.7
$region0: #{sparse_residual_units.7}
  #allocation0 [shape = 'u32[]', space=smem, size = 0x4, offset = 0x4, fixed_abs, tag = 'smem constant byte address 0x4 - core index']
  #allocation1 [shape = 'u32[144,128]{1,0:T(1,128)}', space=vmem, size = 0x12000, scoped, tag = 'internal scratch']
  #allocation2 [shape = 's32[1]{0}', space=sflag, size = 0x4, scoped, tag = 'scoped memory for sparse_residual_units.7']
  #allocation3 [shape = 'u8[512]{0}', space=smem, size = 0x200, scoped, tag = 'prefetched SMEM operand 0']
  %s0 = inlined_call_operand.vmem [shape: s32[2], index: 0, kind: input, shape index: {}]
  %s1 = inlined_call_operand.vmem [shape: bf16[32,128], index: 1, kind: input, shape index: {}]
  %s2 = inlined_call_operand.vmem [shape: f32[1,128], index: 2, kind: input, shape index: {}]
  %s3 = inlined_call_operand.vmem [shape: f32[1,128], index: 3, kind: input, shape index: {}]
  %s4 = inlined_call_operand.vmem [shape: bf16[128,128], index: 4, kind: input, shape index: {}]
  %s5 = inlined_call_operand.vmem [shape: f32[1,128], index: 5, kind: input, shape index: {}]
  %s6 = inlined_call_operand.vmem [shape: bf16[32,128], index: 6, kind: output, shape index: {0}]
  %s7 = inlined_call_operand.vmem [shape: f32[16,256], index: 7, kind: output, shape index: {1}]
  %8 = xla_tuple %s6, %s7
  %s9 = sld [smem:[#allocation0]]
  $region61: #{sparse_residual_units.7} parent=0
    _
  %s11 = ssub.s32 1, %s9
  %s12 = scalar_select 0, %s11, %s9
  %s13 = sshll.u32 %s0, 4
  %s14 = int_to_ptr.vmem [resolvable:$true] %s13
  %16 = dma.vmem_to_smem %s14, 16, [#allocation3], [#allocation2]
  %17 = dma.done [#allocation2], 16
  %18 = sfence
  loop: start=0, step=1, limit=4
  $region2: #{sparse_residual_units.7} parent=0 // loop_pre_header
    _
  $region3: #{sparse_residual_units.7} parent=0 // loop_header
    %s20 = sphi 0, %s24
    %p21 = scmp.ge.s32.totalorder %s20, 4
    %s38 = sphi 0, %s40
    %s41 = sphi 0, %s38
    %s42 = sphi 0, %s41
    %s58 = sphi 0, %s42
    %s62 = sphi 0, %s62
    %s64 = sphi 0, %s62
    %s65 = sphi 0, %s64
    %s79 = sphi 0, %s65
    %s83 = sphi 0, %s83
    %s85 = sphi 0, %s83
    %s86 = sphi 0, %s85
    %s100 = sphi 0, %s86
    %s104 = sphi 0, %s104
    %s106 = sphi 0, %s104
    %s107 = sphi 0, %s106
    %s121 = sphi 0, %s107
    %s125 = sphi 0, %s125
    %s127 = sphi 0, %s125
    %s128 = sphi 0, %s127
    %s142 = sphi 0, %s128
    %s156 = sphi 0, %s158
    %s159 = sphi 0, %s156
    %s160 = sphi 0, %s159
    %s176 = sphi 0, %s160
    %s182 = sphi 0, %s184
    %s185 = sphi 0, %s182
    %s186 = sphi 0, %s185
    %s202 = sphi 0, %s186
  $region4: #{sparse_residual_units.7} parent=0 // loop_header_branch
    %23 = sbr.rel (%p21) target = $region8
  $region5: #{sparse_residual_units.7} parent=0 // loop_body
    %s25 = ssub.s32 %s20, 1
    %s26 = ssub.s32 %s20, 2
    %s27 = sadd.s32 %s20, 1
    %s28 = sld [smem:[#allocation3]]
    %s29 = ssub.s32 %s28, 1
    %p30 = scmp.lt.s32.totalorder %s20, %s29
    %s31 = scalar_select %p30, %s20, %s29
    %s32 = sld [smem:[#allocation3]]
    %s33 = ssub.s32 %s32, 1
    %p34 = scmp.lt.s32.totalorder %s27, %s33
    %s35 = scalar_select %p34, %s27, %s33
    %s36 = ssub.s32 %s31, %s35
    %p37 = scmp.eq.s32.totalorder %s36, 0
    %s39 = sadd.s32 %s38, 1
    %s40 = scalar_select %p37, %s38, %s39
    %p43 = pneg %p37
    %p44 = scmp.eq.s32.totalorder %s20, 1
    %p45 = por %p43, %p44
    %p46 = scmp.ne.s32.totalorder %s38, %s41
    %p47 = scmp.eq.s32.totalorder %s20, 0
    %p48 = por %p46, %p47
    %p49 = scmp.ne.s32.totalorder %s38, %s41
    %p50 = scmp.eq.s32.totalorder %s25, 1
    %p51 = por %p49, %p50
    %p52 = scmp.ne.s32.totalorder %s41, %s42
    %p53 = scmp.eq.s32.totalorder %s25, 0
    %p54 = por %p52, %p53
    %p55 = scmp.ne.s32.totalorder %s41, %s42
    %p56 = scmp.eq.s32.totalorder %s26, 1
    %p57 = por %p55, %p56
    %p59 = scmp.ne.s32.totalorder %s42, %s58
    %p60 = scmp.eq.s32.totalorder %s26, 0
    %p61 = por %p59, %p60
    %s63 = sadd.s32 %s62, 1
    %p66 = scmp.eq.s32.totalorder %s20, 1
    %p67 = scmp.ne.s32.totalorder %s62, %s64
    %p68 = scmp.eq.s32.totalorder %s20, 0
    %p69 = por %p67, %p68
    %p70 = scmp.ne.s32.totalorder %s62, %s64
    %p71 = scmp.eq.s32.totalorder %s25, 1
    %p72 = por %p70, %p71
    %p73 = scmp.ne.s32.totalorder %s64, %s65
    %p74 = scmp.eq.s32.totalorder %s25, 0
    %p75 = por %p73, %p74
    %p76 = scmp.ne.s32.totalorder %s64, %s65
    %p77 = scmp.eq.s32.totalorder %s26, 1
    %p78 = por %p76, %p77
    %p80 = scmp.ne.s32.totalorder %s65, %s79
    %p81 = scmp.eq.s32.totalorder %s26, 0
    %p82 = por %p80, %p81
    %s84 = sadd.s32 %s83, 1
    %p87 = scmp.eq.s32.totalorder %s20, 1
    %p88 = scmp.ne.s32.totalorder %s83, %s85
    %p89 = scmp.eq.s32.totalorder %s20, 0
    %p90 = por %p88, %p89
    %p91 = scmp.ne.s32.totalorder %s83, %s85
    %p92 = scmp.eq.s32.totalorder %s25, 1
    %p93 = por %p91, %p92
    %p94 = scmp.ne.s32.totalorder %s85, %s86
    %p95 = scmp.eq.s32.totalorder %s25, 0
    %p96 = por %p94, %p95
    %p97 = scmp.ne.s32.totalorder %s85, %s86
    %p98 = scmp.eq.s32.totalorder %s26, 1
    %p99 = por %p97, %p98
    %p101 = scmp.ne.s32.totalorder %s86, %s100
    %p102 = scmp.eq.s32.totalorder %s26, 0
    %p103 = por %p101, %p102
    %s105 = sadd.s32 %s104, 1
    %p108 = scmp.eq.s32.totalorder %s20, 1
    %p109 = scmp.ne.s32.totalorder %s104, %s106
    %p110 = scmp.eq.s32.totalorder %s20, 0
    %p111 = por %p109, %p110
    %p112 = scmp.ne.s32.totalorder %s104, %s106
    %p113 = scmp.eq.s32.totalorder %s25, 1
    %p114 = por %p112, %p113
    %p115 = scmp.ne.s32.totalorder %s106, %s107
    %p116 = scmp.eq.s32.totalorder %s25, 0
    %p117 = por %p115, %p116
    %p118 = scmp.ne.s32.totalorder %s106, %s107
    %p119 = scmp.eq.s32.totalorder %s26, 1
    %p120 = por %p118, %p119
    %p122 = scmp.ne.s32.totalorder %s107, %s121
    %p123 = scmp.eq.s32.totalorder %s26, 0
    %p124 = por %p122, %p123
    %s126 = sadd.s32 %s125, 1
    %p129 = scmp.eq.s32.totalorder %s20, 1
    %p130 = scmp.ne.s32.totalorder %s125, %s127
    %p131 = scmp.eq.s32.totalorder %s20, 0
    %p132 = por %p130, %p131
    %p133 = scmp.ne.s32.totalorder %s125, %s127
    %p134 = scmp.eq.s32.totalorder %s25, 1
    %p135 = por %p133, %p134
    %p136 = scmp.ne.s32.totalorder %s127, %s128
    %p137 = scmp.eq.s32.totalorder %s25, 0
    %p138 = por %p136, %p137
    %p139 = scmp.ne.s32.totalorder %s127, %s128
    %p140 = scmp.eq.s32.totalorder %s26, 1
    %p141 = por %p139, %p140
    %p143 = scmp.ne.s32.totalorder %s128, %s142
    %p144 = scmp.eq.s32.totalorder %s26, 0
    %p145 = por %p143, %p144
    %s146 = sld [smem:[#allocation3]]
    %s147 = ssub.s32 %s146, 1
    %p148 = scmp.lt.s32.totalorder %s20, %s147
    %s149 = scalar_select %p148, %s20, %s147
    %s150 = sld [smem:[#allocation3]]
    %s151 = ssub.s32 %s150, 1
    %p152 = scmp.lt.s32.totalorder %s27, %s151
    %s153 = scalar_select %p152, %s27, %s151
    %s154 = ssub.s32 %s149, %s153
    %p155 = scmp.eq.s32.totalorder %s154, 0
    %s157 = sadd.s32 %s156, 1
    %s158 = scalar_select %p155, %s156, %s157
    %p161 = pneg %p155
    %p162 = scmp.eq.s32.totalorder %s20, 1
    %p163 = por %p161, %p162
    %p164 = scmp.ne.s32.totalorder %s156, %s159
    %p165 = scmp.eq.s32.totalorder %s20, 0
    %p166 = por %p164, %p165
    %p167 = scmp.ne.s32.totalorder %s156, %s159
    %p168 = scmp.eq.s32.totalorder %s25, 1
    %p169 = por %p167, %p168
    %p170 = scmp.ne.s32.totalorder %s159, %s160
    %p171 = scmp.eq.s32.totalorder %s25, 0
    %p172 = por %p170, %p171
    %p173 = scmp.ne.s32.totalorder %s159, %s160
    %p174 = scmp.eq.s32.totalorder %s26, 1
    %p175 = por %p173, %p174
    %p177 = scmp.ne.s32.totalorder %s160, %s176
    %p178 = scmp.eq.s32.totalorder %s26, 0
    %p179 = por %p177, %p178
    %s180 = ssub.s32 %s20, %s27
    %p181 = scmp.eq.s32.totalorder %s180, 0
    %s183 = sadd.s32 %s182, 1
    %s184 = scalar_select %p181, %s182, %s183
    %p187 = pneg %p181
    %p188 = scmp.eq.s32.totalorder %s20, 1
    %p189 = por %p187, %p188
    %p190 = scmp.ne.s32.totalorder %s182, %s185
    %p191 = scmp.eq.s32.totalorder %s20, 0
    %p192 = por %p190, %p191
    %p193 = scmp.ne.s32.totalorder %s182, %s185
    %p194 = scmp.eq.s32.totalorder %s25, 1
    %p195 = por %p193, %p194
    %p196 = scmp.ne.s32.totalorder %s185, %s186
    %p197 = scmp.eq.s32.totalorder %s25, 0
    %p198 = por %p196, %p197
    %p199 = scmp.ne.s32.totalorder %s185, %s186
    %p200 = scmp.eq.s32.totalorder %s26, 1
    %p201 = por %p199, %p200
    %p203 = scmp.ne.s32.totalorder %s186, %s202
    %p204 = scmp.eq.s32.totalorder %s26, 0
    %p205 = por %p203, %p204
    %p206 = scmp.le.s32.totalorder 1, %s20
    %p207 = scmp.lt.s32.totalorder %s20, 3
    %p208 = pnand %p206, %p207
    %p209 = pneg %p208
    // Predicated region
    $region9: #{sparse_residual_units.7} parent=5 // pred_check
      _
    $region10: #{sparse_residual_units.7} parent=5 // pred_check_branch
      %211 = sbr.rel (%p208) target = $region12
    $region11: #{sparse_residual_units.7} parent=5 // pred_region
      %s212 = ssub.s32 %s20, 1
      // Predicated region
      $region13: #{sparse_residual_units.7} parent=11 // pred_check
        %p213 = pneg %p75
      $region14: #{sparse_residual_units.7} parent=11 // pred_check_branch
        %215 = sbr.rel (%p213) target = $region16
      $region15: #{sparse_residual_units.7} parent=11 // pred_region
        _
      $region16: #{sparse_residual_units.7} parent=11 // pred_fallthru
        _
      // Predicated region
      $region17: #{sparse_residual_units.7} parent=11 // pred_check
        %p216 = pneg %p96
      $region18: #{sparse_residual_units.7} parent=11 // pred_check_branch
        %218 = sbr.rel (%p216) target = $region20
      $region19: #{sparse_residual_units.7} parent=11 // pred_region
        _
      $region20: #{sparse_residual_units.7} parent=11 // pred_fallthru
        _
      // Predicated region
      $region21: #{sparse_residual_units.7} parent=11 // pred_check
        %p219 = pneg %p117
      $region22: #{sparse_residual_units.7} parent=11 // pred_check_branch
        %221 = sbr.rel (%p219) target = $region24
      $region23: #{sparse_residual_units.7} parent=11 // pred_region
        _
      $region24: #{sparse_residual_units.7} parent=11 // pred_fallthru
        _
      // Predicated region
      $region25: #{sparse_residual_units.7} parent=11 // pred_check
        %p222 = pneg %p138
      $region26: #{sparse_residual_units.7} parent=11 // pred_check_branch
        %224 = sbr.rel (%p222) target = $region28
      $region27: #{sparse_residual_units.7} parent=11 // pred_region
        _
      $region28: #{sparse_residual_units.7} parent=11 // pred_fallthru
        _
    $region12: #{sparse_residual_units.7} parent=5 // pred_fallthru
      _
    %p225 = scmp.lt.s32.totalorder %s20, 2
    // Predicated region
    $region29: #{sparse_residual_units.7} parent=5 // pred_check
      %p226 = pneg %p225
    $region30: #{sparse_residual_units.7} parent=5 // pred_check_branch
      %228 = sbr.rel (%p226) target = $region32
    $region31: #{sparse_residual_units.7} parent=5 // pred_region
      // Predicated region
      $region33: #{sparse_residual_units.7} parent=31 // pred_check
        %p229 = pneg %p48
      $region34: #{sparse_residual_units.7} parent=31 // pred_check_branch
        %231 = sbr.rel (%p229) target = $region36
      $region35: #{sparse_residual_units.7} parent=31 // pred_region
        %s232 = sld [smem:[#allocation3]]
        %s233 = ssub.s32 %s232, 1
        %p234 = scmp.lt.s32.totalorder %s20, %s233
        %s235 = scalar_select %p234, %s20, %s233
        %s236 = smul.u32 2, %s235
        %p237 = scmp.lt.s32.totalorder %s236, 3
        %s238 = scalar_select %p237, %s236, 3
        %s239 = smul.addr %s238, 4
        %s240 = scalar_lea.vmem %s1, %s239
        %s241 = sld [smem:[#allocation3]]
        %s242 = ssub.s32 %s241, 1
        %p243 = scmp.lt.s32.totalorder %s20, %s242
        %s244 = scalar_select %p243, %s20, %s242
        %s245 = smul.u32 2, %s244
      $region36: #{sparse_residual_units.7} parent=31 // pred_fallthru
        _
    $region32: #{sparse_residual_units.7} parent=5 // pred_fallthru
      _
    %p246 = scmp.le.s32.totalorder 1, %s20
    %p247 = scmp.lt.s32.totalorder %s20, 3
    %p248 = pnand %p246, %p247
    %p249 = pneg %p248
    // Predicated region
    $region37: #{sparse_residual_units.7} parent=5 // pred_check
      _
    $region38: #{sparse_residual_units.7} parent=5 // pred_check_branch
      %251 = sbr.rel (%p248) target = $region40
    $region39: #{sparse_residual_units.7} parent=5 // pred_region
      %s252 = ssub.s32 %s20, 1
      %s253 = sld [smem:[#allocation3]]
      %s254 = ssub.s32 %s253, 1
      %p255 = scmp.lt.s32.totalorder %s25, %s254
      %s256 = scalar_select %p255, %s25, %s254
      %s257 = smul.u32 2, %s256
      %p258 = scmp.lt.s32.totalorder %s257, 3
      %s259 = scalar_select %p258, %s257, 3
      %s260 = smul.addr %s259, 4
      %s261 = scalar_lea.vmem %s1, %s260
      %p262 = pneg %p54
      %p263 = pneg %p51
      %p264 = pneg %p75
      %p265 = pneg %p72
      %p266 = pneg %p96
      %p267 = pneg %p93
      %p268 = pneg %p117
      %p269 = pneg %p114
      %p270 = pneg %p138
      %p271 = pneg %p135
      %p272 = pneg %p172
      %p273 = pneg %p169
      %s274 = sld [smem:[#allocation3]]
      %s275 = ssub.s32 %s274, 1
      %p276 = scmp.lt.s32.totalorder %s25, %s275
      %s277 = scalar_select %p276, %s25, %s275
      %s278 = smul.u32 2, %s277
      %p279 = scmp.lt.s32.totalorder %s278, 3
      %s280 = scalar_select %p279, %s278, 3
      %s281 = smul.addr %s280, 4
      %s282 = scalar_lea.vmem %s6, %s281
      %p283 = pneg %p198
      %p284 = pneg %p195
      %p285 = scmp.lt.s32.totalorder %s25, 1
      %s286 = scalar_select %p285, %s25, 1
      %s287 = smul.addr %s286, 2
      %s288 = smul.addr %s287, 8
      %s289 = scalar_lea.vmem %s7, %s288
      %s290 = sld [smem:[#allocation3]]
      %s291 = ssub.s32 %s290, 1
      %p292 = scmp.lt.s32.totalorder %s25, %s291
      %s293 = scalar_select %p292, %s25, %s291
      %s294 = smul.u32 2, %s293
      %p295 = scmp.lt.s32.totalorder %s294, 3
      %s296 = scalar_select %p295, %s294, 3
      %s297 = smul.addr %s296, 4
      %s298 = scalar_lea.vmem %s1, %s297
      %s299 = sld [smem:[#allocation3]]
      %s300 = ssub.s32 %s299, 1
      %p301 = scmp.lt.s32.totalorder %s25, %s300
      %s302 = scalar_select %p301, %s25, %s300
      %s303 = smul.u32 2, %s302
      %s304 = sld [smem:[#allocation3]]
      %s305 = ssub.s32 %s304, 1
      %p306 = scmp.lt.s32.totalorder %s25, %s305
      %s307 = scalar_select %p306, %s25, %s305
      %s308 = smul.u32 2, %s307
      %p309 = scmp.lt.s32.totalorder %s308, 3
      %s310 = scalar_select %p309, %s308, 3
      %s311 = smul.addr %s310, 4
      %s312 = scalar_lea.vmem %s6, %s311
      %s313 = sld [smem:[#allocation3]]
      %s314 = ssub.s32 %s313, 1
      %p315 = scmp.lt.s32.totalorder %s25, %s314
      %s316 = scalar_select %p315, %s25, %s314
      %s317 = smul.u32 2, %s316
      %p318 = scmp.lt.s32.totalorder %s25, 1
      %s319 = scalar_select %p318, %s25, 1
      %s320 = smul.addr %s319, 2
      %s321 = smul.addr %s320, 8
      %s322 = scalar_lea.vmem %s7, %s321
      %v324 = vld [vmem:[%s298] sm:$0xf]
      %v325 = vld [vmem:[%s298 + $0x4] sm:$0xf]
      %v326 = vld [vmem:[%s2] sm:$0x1]
      %v327 = vunpack.c.l.bf16 %v324
      %v328 = vunpack.c.l.bf16 %v325
      %v330 = vlaneseq
      %v331 = vshrl.u32 %v330, 7
      %v332 = vsub.s32 0, %v331
      %v333 = vrot.slane %v326, %v332
      %v335 = vmul.f32 %v327, %v333
      %v336 = vmul.f32 %v328, %v333
      %v337 = vld [vmem:[%s3] sm:$0x1]
      %v339 = vlaneseq
      %v340 = vshrl.u32 %v339, 7
      %v341 = vsub.s32 0, %v340
      %v342 = vrot.slane %v337, %v341
      %v344 = vadd.f32 %v335, %v342
      %v345 = vadd.f32 %v336, %v342
      %v346 = vmax.f32 %v344, 0.0
      %v347 = vmax.f32 %v345, 0.0
      %v348 = vpack.c.bf16 %v347, %v346
      %v349 = vld [vmem:[%s4] sm:$0xf]
      %v350 = vld [vmem:[%s4 + $0x4] sm:$0xf]
      %v351 = vld [vmem:[%s4 + $0x8] sm:$0xf]
      %v352 = vld [vmem:[%s4 + $0xc] sm:$0xf]
      %v353 = vld [vmem:[%s4 + $0x10] sm:$0xf]
      %v354 = vld [vmem:[%s4 + $0x14] sm:$0xf]
      %v355 = vld [vmem:[%s4 + $0x18] sm:$0xf]
      %v356 = vld [vmem:[%s4 + $0x1c] sm:$0xf]
      %v357 = vld [vmem:[%s4 + $0x20] sm:$0xf]
      %v358 = vld [vmem:[%s4 + $0x24] sm:$0xf]
      %v359 = vld [vmem:[%s4 + $0x28] sm:$0xf]
      %v360 = vld [vmem:[%s4 + $0x2c] sm:$0xf]
      %v361 = vld [vmem:[%s4 + $0x30] sm:$0xf]
      %v362 = vld [vmem:[%s4 + $0x34] sm:$0xf]
      %v363 = vld [vmem:[%s4 + $0x38] sm:$0xf]
      %v364 = vld [vmem:[%s4 + $0x3c] sm:$0xf]
      %v365 = vld [vmem:[%s5] sm:$0x1]
      %v367 = vlaneseq
      %v368 = vshrl.u32 %v367, 7
      %v369 = vsub.s32 0, %v368
      %v370 = vrot.slane %v365, %v369
      %v388 = vunpack.c.l.b16 %v349
      %v389 = vunpack.c.l.b16 %v350
      %v390 = vunpack.c.l.b16 %v351
      %v391 = vunpack.c.l.b16 %v352
      %v392 = vunpack.c.l.b16 %v353
      %v393 = vunpack.c.l.b16 %v354
      %v394 = vunpack.c.l.b16 %v355
      %v395 = vunpack.c.l.b16 %v356
      %v396 = vunpack.c.l.b16 %v357
      %v397 = vunpack.c.l.b16 %v358
      %v398 = vunpack.c.l.b16 %v359
      %v399 = vunpack.c.l.b16 %v360
      %v400 = vunpack.c.l.b16 %v361
      %v401 = vunpack.c.l.b16 %v362
      %v402 = vunpack.c.l.b16 %v363
      %v403 = vunpack.c.l.b16 %v364
      %v404 = vpack.c.b16 %v389, %v388
      %v405 = vpack.c.b16 %v391, %v390
      %v406 = vpack.c.b16 %v393, %v392
      %v407 = vpack.c.b16 %v395, %v394
      %v408 = vpack.c.b16 %v397, %v396
      %v409 = vpack.c.b16 %v399, %v398
      %v410 = vpack.c.b16 %v401, %v400
      %v411 = vpack.c.b16 %v403, %v402
      %420 = vmatprep.subr.bf16.mxu0 0
      %421 = vmatpush1.bf16.msra.mxu0 %v404
      %422 = vmatprep.subr.bf16.mxu0 0
      %423 = vmatpush1.bf16.msra.mxu0 %v405
      %424 = vmatprep.subr.bf16.mxu0 0
      %425 = vmatpush1.bf16.msra.mxu0 %v406
      %426 = vmatprep.subr.bf16.mxu0 0
      %427 = vmatpush1.bf16.msra.mxu0 %v407
      %428 = vmatprep.subr.bf16.mxu0 0
      %429 = vmatpush1.bf16.msra.mxu0 %v408
      %430 = vmatprep.subr.bf16.mxu0 0
      %431 = vmatpush1.bf16.msra.mxu0 %v409
      %432 = vmatprep.subr.bf16.mxu0 0
      %433 = vmatpush1.bf16.msra.mxu0 %v410
      %434 = vmatprep.subr.bf16.mxu0 0
      %435 = vmatpush1.bf16.msra.mxu0 %v411
      %436 = vmatprep.subr.bf16.mxu0 0
      %437 = vmatpush1.bf16.msra.mxu0 0
      %438 = vmatprep.subr.bf16.mxu0 0
      %439 = vmatpush1.bf16.msra.mxu0 0
      %440 = vmatprep.subr.bf16.mxu0 0
      %441 = vmatpush1.bf16.msra.mxu0 0
      %442 = vmatprep.subr.bf16.mxu0 0
      %443 = vmatpush1.bf16.msra.mxu0 0
      %444 = vmatprep.subr.bf16.mxu0 0
      %445 = vmatpush1.bf16.msra.mxu0 0
      %446 = vmatprep.subr.bf16.mxu0 0
      %447 = vmatpush1.bf16.msra.mxu0 0
      %448 = vmatprep.subr.bf16.mxu0 0
      %449 = vmatpush1.bf16.msra.mxu0 0
      %450 = vmatprep.subr.bf16.mxu0 0
      %451 = vmatpush1.bf16.msra.mxu0 0
      %452 = vmatprep.mubr.bf16.mxu0 0
      %453 = vmatmul.mubr.bf16.gmra.mrb[0].mxu0 %v348
      %v454 = vpop.f32.mrb[0].mxu0
      %v455 = vadd.f32 %v370, %v454
      %v456 = vpop.f32.mrb[0].mxu0
      %v457 = vpop.f32.mrb[0].mxu0
      %v458 = vadd.f32 %v370, %v457
      %v459 = vpop.f32.mrb[0].mxu0
      %460 = vdwg.mxu0
      %v461 = vpack.c.bf16 %v458, %v455
      %v463 = vunpack.c.l.b16 %v461
      %v464 = vunpack.c.h.b16 %v461
      %v465 = vpack.c.b16 %v463, %v463
      %v466 = vpack.c.b16 %v464, %v464
      %469 = vst [vmem:[%s312] sm:$0xf] %v465
      %470 = vst [vmem:[%s312 + $0x4] sm:$0xf] %v466
      %s471 = smul.u32 %s25, 16
      %v472 = vlaneseq
      %v473 = vshrl.u32 %v472, 7
      %v474 = vadd.s32 %v473, 8
      %v475 = vstv %s471
      %v476 = vadd.s32 %v475, %v473
      %v477 = vadd.s32 %v475, %v474
      %s478 = sld [smem:[#allocation3 + $0x1]]
      %v479 = vstv %s478
      %vm480 = vcmp.lt.s32.totalorder %v476, %v479
      %vm481 = vcmp.lt.s32.totalorder %v477, %v479
      %v482 = vsel %vm480, 1, 0
      %v483 = vsel %vm481, 1, 0
      %v484 = vcvt.s32.f32 %v482
      %v485 = vcvt.s32.f32 %v483
      %v486 = vld [vmem:[%s5] sm:$0x1]
      %v488 = vlaneseq
      %v489 = vshrl.u32 %v488, 7
      %v490 = vsub.s32 0, %v489
      %v491 = vrot.slane %v486, %v490
      %v493 = vsub.f32 %v455, %v491
      %v494 = vsub.f32 %v458, %v491
      %v495 = vmul.f32 %v484, %v493
      %v496 = vmul.f32 %v485, %v494
      %v497 = vadd.f32 %v495, %v496
      %v498 = vrot.slane %v497, 4
      %v499 = vadd.f32 %v497, %v498
      %v500 = vrot.slane %v499, 2
      %v501 = vadd.f32 %v499, %v500
      %v502 = vrot.slane %v501, 1
      %v503 = vadd.f32 %v501, %v502
      %504 = vst [vmem:[%s322] sm:$0xff] %v503
      %v505 = vmul.f32 %v495, %v493
      %v506 = vmul.f32 %v496, %v494
      %v507 = vadd.f32 %v505, %v506
      %v508 = vrot.slane %v507, 4
      %v509 = vadd.f32 %v507, %v508
      %v510 = vrot.slane %v509, 2
      %v511 = vadd.f32 %v509, %v510
      %v512 = vrot.slane %v511, 1
      %v513 = vadd.f32 %v511, %v512
      %514 = vst [vmem:[%s322 + $0x8] sm:$0xff] %v513
      %s515 = sld [smem:[#allocation3]]
      %s516 = ssub.s32 %s515, 1
      %p517 = scmp.lt.s32.totalorder %s25, %s516
      %s518 = scalar_select %p517, %s25, %s516
      %s519 = smul.u32 2, %s518
      %p520 = scmp.lt.s32.totalorder %s519, 3
      %s521 = scalar_select %p520, %s519, 3
      %s522 = smul.addr %s521, 4
      %s523 = scalar_lea.vmem %s6, %s522
      %p524 = scmp.lt.s32.totalorder %s25, 1
      %s525 = scalar_select %p524, %s25, 1
      %s526 = smul.addr %s525, 2
      %s527 = smul.addr %s526, 8
      %s528 = scalar_lea.vmem %s7, %s527
      // Predicated region
      $region41: #{sparse_residual_units.7} parent=39 // pred_check
        %p529 = pneg %p169
      $region42: #{sparse_residual_units.7} parent=39 // pred_check_branch
        %531 = sbr.rel (%p529) target = $region44
      $region43: #{sparse_residual_units.7} parent=39 // pred_region
        %s532 = sld [smem:[#allocation3]]
        %s533 = ssub.s32 %s532, 1
        %p534 = scmp.lt.s32.totalorder %s25, %s533
        %s535 = scalar_select %p534, %s25, %s533
        %s536 = smul.u32 2, %s535
      $region44: #{sparse_residual_units.7} parent=39 // pred_fallthru
        _
      // Predicated region
      $region45: #{sparse_residual_units.7} parent=39 // pred_check
        %p537 = pneg %p195
      $region46: #{sparse_residual_units.7} parent=39 // pred_check_branch
        %539 = sbr.rel (%p537) target = $region48
      $region47: #{sparse_residual_units.7} parent=39 // pred_region
        _
      $region48: #{sparse_residual_units.7} parent=39 // pred_fallthru
        _
    $region40: #{sparse_residual_units.7} parent=5 // pred_fallthru
      _
    %p540 = scmp.le.s32.totalorder 2, %s20
    // Predicated region
    $region49: #{sparse_residual_units.7} parent=5 // pred_check
      %p541 = pneg %p540
    $region50: #{sparse_residual_units.7} parent=5 // pred_check_branch
      %543 = sbr.rel (%p541) target = $region52
    $region51: #{sparse_residual_units.7} parent=5 // pred_region
      %s544 = ssub.s32 %s20, 2
      // Predicated region
      $region53: #{sparse_residual_units.7} parent=51 // pred_check
        %p545 = pneg %p175
      $region54: #{sparse_residual_units.7} parent=51 // pred_check_branch
        %547 = sbr.rel (%p545) target = $region56
      $region55: #{sparse_residual_units.7} parent=51 // pred_region
        %s548 = sld [smem:[#allocation3]]
        %s549 = ssub.s32 %s548, 1
        %p550 = scmp.lt.s32.totalorder %s26, %s549
        %s551 = scalar_select %p550, %s26, %s549
        %s552 = smul.u32 2, %s551
        %p553 = scmp.lt.s32.totalorder %s552, 3
        %s554 = scalar_select %p553, %s552, 3
        %s555 = smul.addr %s554, 4
        %s556 = scalar_lea.vmem %s6, %s555
      $region56: #{sparse_residual_units.7} parent=51 // pred_fallthru
        _
      // Predicated region
      $region57: #{sparse_residual_units.7} parent=51 // pred_check
        %p557 = pneg %p201
      $region58: #{sparse_residual_units.7} parent=51 // pred_check_branch
        %559 = sbr.rel (%p557) target = $region60
      $region59: #{sparse_residual_units.7} parent=51 // pred_region
        %p560 = scmp.lt.s32.totalorder %s26, 1
        %s561 = scalar_select %p560, %s26, 1
        %s562 = smul.addr %s561, 2
        %s563 = smul.addr %s562, 8
        %s564 = scalar_lea.vmem %s7, %s563
      $region60: #{sparse_residual_units.7} parent=51 // pred_fallthru
        _
    $region52: #{sparse_residual_units.7} parent=5 // pred_fallthru
      _
  $region6: #{sparse_residual_units.7} parent=0 // loop_footer
    %s24 = sadd.s32 1, %s20
  $region7: #{sparse_residual_units.7} parent=0 // loop_footer_branch
    %19 = sbr.rel target = $region3
  $region8: #{sparse_residual_units.7} parent=0 // loop_exit
    _

// kernel: sparse_residual_units.11
$region0: #{sparse_residual_units.11}
  #allocation0 [shape = 'u32[]', space=smem, size = 0x4, offset = 0x4, fixed_abs, tag = 'smem constant byte address 0x4 - core index']
  #allocation1 [shape = 'u32[144,128]{1,0:T(1,128)}', space=vmem, size = 0x12000, scoped, tag = 'internal scratch']
  #allocation2 [shape = 's32[1]{0}', space=sflag, size = 0x4, scoped, tag = 'scoped memory for sparse_residual_units.11']
  #allocation3 [shape = 'u8[512]{0}', space=smem, size = 0x200, scoped, tag = 'prefetched SMEM operand 0']
  %s0 = inlined_call_operand.vmem [shape: s32[2], index: 0, kind: input, shape index: {}]
  %s1 = inlined_call_operand.vmem [shape: bf16[32,128], index: 1, kind: input, shape index: {}]
  %s2 = inlined_call_operand.vmem [shape: f32[1,128], index: 2, kind: input, shape index: {}]
  %s3 = inlined_call_operand.vmem [shape: f32[1,128], index: 3, kind: input, shape index: {}]
  %s4 = inlined_call_operand.vmem [shape: f32[32,128], index: 4, kind: input, shape index: {}]
  %s5 = inlined_call_operand.vmem [shape: f32[32,128], index: 5, kind: output, shape index: {}]
  %s6 = sld [smem:[#allocation0]]
  $region49: #{sparse_residual_units.11} parent=0
    _
  %s8 = ssub.s32 1, %s6
  %s9 = scalar_select 0, %s8, %s6
  %s10 = sshll.u32 %s0, 4
  %s11 = int_to_ptr.vmem [resolvable:$true] %s10
  %13 = dma.vmem_to_smem %s11, 16, [#allocation3], [#allocation2]
  %14 = dma.done [#allocation2], 16
  %15 = sfence
  loop: start=0, step=1, limit=4
  $region2: #{sparse_residual_units.11} parent=0 // loop_pre_header
    _
  $region3: #{sparse_residual_units.11} parent=0 // loop_header
    %s17 = sphi 0, %s21
    %p18 = scmp.ge.s32.totalorder %s17, 4
    %s35 = sphi 0, %s37
    %s38 = sphi 0, %s35
    %s39 = sphi 0, %s38
    %s55 = sphi 0, %s39
    %s59 = sphi 0, %s59
    %s61 = sphi 0, %s59
    %s62 = sphi 0, %s61
    %s76 = sphi 0, %s62
    %s80 = sphi 0, %s80
    %s82 = sphi 0, %s80
    %s83 = sphi 0, %s82
    %s97 = sphi 0, %s83
    %s103 = sphi 0, %s105
    %s106 = sphi 0, %s103
    %s107 = sphi 0, %s106
    %s123 = sphi 0, %s107
    %s129 = sphi 0, %s131
    %s132 = sphi 0, %s129
    %s133 = sphi 0, %s132
    %s149 = sphi 0, %s133
  $region4: #{sparse_residual_units.11} parent=0 // loop_header_branch
    %20 = sbr.rel (%p18) target = $region8
  $region5: #{sparse_residual_units.11} parent=0 // loop_body
    %s22 = ssub.s32 %s17, 1
    %s23 = ssub.s32 %s17, 2
    %s24 = sadd.s32 %s17, 1
    %s25 = sld [smem:[#allocation3]]
    %s26 = ssub.s32 %s25, 1
    %p27 = scmp.lt.s32.totalorder %s17, %s26
    %s28 = scalar_select %p27, %s17, %s26
    %s29 = sld [smem:[#allocation3]]
    %s30 = ssub.s32 %s29, 1
    %p31 = scmp.lt.s32.totalorder %s24, %s30
    %s32 = scalar_select %p31, %s24, %s30
    %s33 = ssub.s32 %s28, %s32
    %p34 = scmp.eq.s32.totalorder %s33, 0
    %s36 = sadd.s32 %s35, 1
    %s37 = scalar_select %p34, %s35, %s36
    %p40 = pneg %p34
    %p41 = scmp.eq.s32.totalorder %s17, 1
    %p42 = por %p40, %p41
    %p43 = scmp.ne.s32.totalorder %s35, %s38
    %p44 = scmp.eq.s32.totalorder %s17, 0
    %p45 = por %p43, %p44
    %p46 = scmp.ne.s32.totalorder %s35, %s38
    %p47 = scmp.eq.s32.totalorder %s22, 1
    %p48 = por %p46, %p47
    %p49 = scmp.ne.s32.totalorder %s38, %s39
    %p50 = scmp.eq.s32.totalorder %s22, 0
    %p51 = por %p49, %p50
    %p52 = scmp.ne.s32.totalorder %s38, %s39
    %p53 = scmp.eq.s32.totalorder %s23, 1
    %p54 = por %p52, %p53
    %p56 = scmp.ne.s32.totalorder %s39, %s55
    %p57 = scmp.eq.s32.totalorder %s23, 0
    %p58 = por %p56, %p57
    %s60 = sadd.s32 %s59, 1
    %p63 = scmp.eq.s32.totalorder %s17, 1
    %p64 = scmp.ne.s32.totalorder %s59, %s61
    %p65 = scmp.eq.s32.totalorder %s17, 0
    %p66 = por %p64, %p65
    %p67 = scmp.ne.s32.totalorder %s59, %s61
    %p68 = scmp.eq.s32.totalorder %s22, 1
    %p69 = por %p67, %p68
    %p70 = scmp.ne.s32.totalorder %s61, %s62
    %p71 = scmp.eq.s32.totalorder %s22, 0
    %p72 = por %p70, %p71
    %p73 = scmp.ne.s32.totalorder %s61, %s62
    %p74 = scmp.eq.s32.totalorder %s23, 1
    %p75 = por %p73, %p74
    %p77 = scmp.ne.s32.totalorder %s62, %s76
    %p78 = scmp.eq.s32.totalorder %s23, 0
    %p79 = por %p77, %p78
    %s81 = sadd.s32 %s80, 1
    %p84 = scmp.eq.s32.totalorder %s17, 1
    %p85 = scmp.ne.s32.totalorder %s80, %s82
    %p86 = scmp.eq.s32.totalorder %s17, 0
    %p87 = por %p85, %p86
    %p88 = scmp.ne.s32.totalorder %s80, %s82
    %p89 = scmp.eq.s32.totalorder %s22, 1
    %p90 = por %p88, %p89
    %p91 = scmp.ne.s32.totalorder %s82, %s83
    %p92 = scmp.eq.s32.totalorder %s22, 0
    %p93 = por %p91, %p92
    %p94 = scmp.ne.s32.totalorder %s82, %s83
    %p95 = scmp.eq.s32.totalorder %s23, 1
    %p96 = por %p94, %p95
    %p98 = scmp.ne.s32.totalorder %s83, %s97
    %p99 = scmp.eq.s32.totalorder %s23, 0
    %p100 = por %p98, %p99
    %s101 = ssub.s32 %s17, %s24
    %p102 = scmp.eq.s32.totalorder %s101, 0
    %s104 = sadd.s32 %s103, 1
    %s105 = scalar_select %p102, %s103, %s104
    %p108 = pneg %p102
    %p109 = scmp.eq.s32.totalorder %s17, 1
    %p110 = por %p108, %p109
    %p111 = scmp.ne.s32.totalorder %s103, %s106
    %p112 = scmp.eq.s32.totalorder %s17, 0
    %p113 = por %p111, %p112
    %p114 = scmp.ne.s32.totalorder %s103, %s106
    %p115 = scmp.eq.s32.totalorder %s22, 1
    %p116 = por %p114, %p115
    %p117 = scmp.ne.s32.totalorder %s106, %s107
    %p118 = scmp.eq.s32.totalorder %s22, 0
    %p119 = por %p117, %p118
    %p120 = scmp.ne.s32.totalorder %s106, %s107
    %p121 = scmp.eq.s32.totalorder %s23, 1
    %p122 = por %p120, %p121
    %p124 = scmp.ne.s32.totalorder %s107, %s123
    %p125 = scmp.eq.s32.totalorder %s23, 0
    %p126 = por %p124, %p125
    %s127 = ssub.s32 %s17, %s24
    %p128 = scmp.eq.s32.totalorder %s127, 0
    %s130 = sadd.s32 %s129, 1
    %s131 = scalar_select %p128, %s129, %s130
    %p134 = pneg %p128
    %p135 = scmp.eq.s32.totalorder %s17, 1
    %p136 = por %p134, %p135
    %p137 = scmp.ne.s32.totalorder %s129, %s132
    %p138 = scmp.eq.s32.totalorder %s17, 0
    %p139 = por %p137, %p138
    %p140 = scmp.ne.s32.totalorder %s129, %s132
    %p141 = scmp.eq.s32.totalorder %s22, 1
    %p142 = por %p140, %p141
    %p143 = scmp.ne.s32.totalorder %s132, %s133
    %p144 = scmp.eq.s32.totalorder %s22, 0
    %p145 = por %p143, %p144
    %p146 = scmp.ne.s32.totalorder %s132, %s133
    %p147 = scmp.eq.s32.totalorder %s23, 1
    %p148 = por %p146, %p147
    %p150 = scmp.ne.s32.totalorder %s133, %s149
    %p151 = scmp.eq.s32.totalorder %s23, 0
    %p152 = por %p150, %p151
    %p153 = scmp.le.s32.totalorder 1, %s17
    %p154 = scmp.lt.s32.totalorder %s17, 3
    %p155 = pnand %p153, %p154
    %p156 = pneg %p155
    // Predicated region
    $region9: #{sparse_residual_units.11} parent=5 // pred_check
      _
    $region10: #{sparse_residual_units.11} parent=5 // pred_check_branch
      %158 = sbr.rel (%p155) target = $region12
    $region11: #{sparse_residual_units.11} parent=5 // pred_region
      %s159 = ssub.s32 %s17, 1
      // Predicated region
      $region13: #{sparse_residual_units.11} parent=11 // pred_check
        %p160 = pneg %p72
      $region14: #{sparse_residual_units.11} parent=11 // pred_check_branch
        %162 = sbr.rel (%p160) target = $region16
      $region15: #{sparse_residual_units.11} parent=11 // pred_region
        _
      $region16: #{sparse_residual_units.11} parent=11 // pred_fallthru
        _
      // Predicated region
      $region17: #{sparse_residual_units.11} parent=11 // pred_check
        %p163 = pneg %p93
      $region18: #{sparse_residual_units.11} parent=11 // pred_check_branch
        %165 = sbr.rel (%p163) target = $region20
      $region19: #{sparse_residual_units.11} parent=11 // pred_region
        _
      $region20: #{sparse_residual_units.11} parent=11 // pred_fallthru
        _
    $region12: #{sparse_residual_units.11} parent=5 // pred_fallthru
      _
    %p166 = scmp.lt.s32.totalorder %s17, 2
    // Predicated region
    $region21: #{sparse_residual_units.11} parent=5 // pred_check
      %p167 = pneg %p166
    $region22: #{sparse_residual_units.11} parent=5 // pred_check_branch
      %169 = sbr.rel (%p167) target = $region24
    $region23: #{sparse_residual_units.11} parent=5 // pred_region
      // Predicated region
      $region25: #{sparse_residual_units.11} parent=23 // pred_check
        %p170 = pneg %p45
      $region26: #{sparse_residual_units.11} parent=23 // pred_check_branch
        %172 = sbr.rel (%p170) target = $region28
      $region27: #{sparse_residual_units.11} parent=23 // pred_region
        %s173 = sld [smem:[#allocation3]]
        %s174 = ssub.s32 %s173, 1
        %p175 = scmp.lt.s32.totalorder %s17, %s174
        %s176 = scalar_select %p175, %s17, %s174
        %s177 = smul.u32 2, %s176
        %p178 = scmp.lt.s32.totalorder %s177, 3
        %s179 = scalar_select %p178, %s177, 3
        %s180 = smul.addr %s179, 4
        %s181 = scalar_lea.vmem %s1, %s180
        %s182 = sld [smem:[#allocation3]]
        %s183 = ssub.s32 %s182, 1
        %p184 = scmp.lt.s32.totalorder %s17, %s183
        %s185 = scalar_select %p184, %s17, %s183
        %s186 = smul.u32 2, %s185
      $region28: #{sparse_residual_units.11} parent=23 // pred_fallthru
        _
      // Predicated region
      $region29: #{sparse_residual_units.11} parent=23 // pred_check
        %p187 = pneg %p113
      $region30: #{sparse_residual_units.11} parent=23 // pred_check_branch
        %189 = sbr.rel (%p187) target = $region32
      $region31: #{sparse_residual_units.11} parent=23 // pred_region
        %s190 = smul.u32 2, %s17
        %p191 = scmp.lt.s32.totalorder %s190, 3
        %s192 = scalar_select %p191, %s190, 3
        %s193 = smul.addr %s192, 8
        %s194 = scalar_lea.vmem %s4, %s193
        %s195 = smul.u32 2, %s17
      $region32: #{sparse_residual_units.11} parent=23 // pred_fallthru
        _
    $region24: #{sparse_residual_units.11} parent=5 // pred_fallthru
      _
    %p196 = scmp.le.s32.totalorder 1, %s17
    %p197 = scmp.lt.s32.totalorder %s17, 3
    %p198 = pnand %p196, %p197
    %p199 = pneg %p198
    // Predicated region
    $region33: #{sparse_residual_units.11} parent=5 // pred_check
      _
    $region34: #{sparse_residual_units.11} parent=5 // pred_check_branch
      %201 = sbr.rel (%p198) target = $region36
    $region35: #{sparse_residual_units.11} parent=5 // pred_region
      %s202 = ssub.s32 %s17, 1
      %s203 = sld [smem:[#allocation3]]
      %s204 = ssub.s32 %s203, 1
      %p205 = scmp.lt.s32.totalorder %s22, %s204
      %s206 = scalar_select %p205, %s22, %s204
      %s207 = smul.u32 2, %s206
      %p208 = scmp.lt.s32.totalorder %s207, 3
      %s209 = scalar_select %p208, %s207, 3
      %s210 = smul.addr %s209, 4
      %s211 = scalar_lea.vmem %s1, %s210
      %p212 = pneg %p51
      %p213 = pneg %p48
      %p214 = pneg %p72
      %p215 = pneg %p69
      %p216 = pneg %p93
      %p217 = pneg %p90
      %s218 = smul.u32 2, %s22
      %p219 = scmp.lt.s32.totalorder %s218, 3
      %s220 = scalar_select %p219, %s218, 3
      %s221 = smul.addr %s220, 8
      %s222 = scalar_lea.vmem %s4, %s221
      %p223 = pneg %p119
      %p224 = pneg %p116
      %p225 = pneg %p145
      %p226 = pneg %p142
      %s227 = smul.u32 2, %s22
      %p228 = scmp.lt.s32.totalorder %s227, 3
      %s229 = scalar_select %p228, %s227, 3
      %s230 = smul.addr %s229, 8
      %s231 = scalar_lea.vmem %s5, %s230
      %s232 = sld [smem:[#allocation3]]
      %s233 = ssub.s32 %s232, 1
      %p234 = scmp.lt.s32.totalorder %s22, %s233
      %s235 = scalar_select %p234, %s22, %s233
      %s236 = smul.u32 2, %s235
      %p237 = scmp.lt.s32.totalorder %s236, 3
      %s238 = scalar_select %p237, %s236, 3
      %s239 = smul.addr %s238, 4
      %s240 = scalar_lea.vmem %s1, %s239
      %s241 = sld [smem:[#allocation3]]
      %s242 = ssub.s32 %s241, 1
      %p243 = scmp.lt.s32.totalorder %s22, %s242
      %s244 = scalar_select %p243, %s22, %s242
      %s245 = smul.u32 2, %s244
      %s246 = smul.u32 2, %s22
      %p247 = scmp.lt.s32.totalorder %s246, 3
      %s248 = scalar_select %p247, %s246, 3
      %s249 = smul.addr %s248, 8
      %s250 = scalar_lea.vmem %s4, %s249
      %s251 = smul.u32 2, %s22
      %s252 = smul.u32 2, %s22
      %p253 = scmp.lt.s32.totalorder %s252, 3
      %s254 = scalar_select %p253, %s252, 3
      %s255 = smul.addr %s254, 8
      %s256 = scalar_lea.vmem %s5, %s255
      %s257 = smul.u32 2, %s22
      %s258 = smul.u32 %s22, 16
      %v259 = vlaneseq
      %v260 = vshrl.u32 %v259, 7
      %v261 = vadd.s32 %v260, 8
      %v262 = vstv %s258
      %v263 = vadd.s32 %v262, %v260
      %v264 = vadd.s32 %v262, %v261
      %s265 = sld [smem:[#allocation3 + $0x1]]
      %v266 = vstv %s265
      %vm267 = vcmp.lt.s32.totalorder %v263, %v266
      %vm268 = vcmp.lt.s32.totalorder %v264, %v266
      %v269 = vsel %vm267, 1, 0
      %v270 = vsel %vm268, 1, 0
      %v271 = vcvt.s32.f32 %v269
      %v272 = vcvt.s32.f32 %v270
      %v273 = vld [vmem:[%s240] sm:$0xf]
      %v274 = vld [vmem:[%s240 + $0x4] sm:$0xf]
      %v275 = vld [vmem:[%s2] sm:$0x1]
      %v276 = vunpack.c.l.bf16 %v273
      %v277 = vunpack.c.l.bf16 %v274
      %v279 = vlaneseq
      %v280 = vshrl.u32 %v279, 7
      %v281 = vsub.s32 0, %v280
      %v282 = vrot.slane %v275, %v281
      %v284 = vmul.f32 %v276, %v282
      %v285 = vmul.f32 %v277, %v282
      %v286 = vld [vmem:[%s3] sm:$0x1]
      %v288 = vlaneseq
      %v289 = vshrl.u32 %v288, 7
      %v290 = vsub.s32 0, %v289
      %v291 = vrot.slane %v286, %v290
      %v293 = vadd.f32 %v284, %v291
      %v294 = vadd.f32 %v285, %v291
      %v295 = vmax.f32 %v293, 0.0
      %v296 = vmax.f32 %v294, 0.0
      %v297 = vld [vmem:[%s250] sm:$0xff]
      %v298 = vld [vmem:[%s250 + $0x8] sm:$0xff]
      %v299 = vmul.f32 %v271, %v295
      %v300 = vmul.f32 %v272, %v296
      %v301 = vadd.f32 %v297, %v299
      %v302 = vadd.f32 %v298, %v300
      %303 = vst [vmem:[%s256] sm:$0xff] %v301
      %304 = vst [vmem:[%s256 + $0x8] sm:$0xff] %v302
      %s305 = smul.u32 2, %s22
      %p306 = scmp.lt.s32.totalorder %s305, 3
      %s307 = scalar_select %p306, %s305, 3
      %s308 = smul.addr %s307, 8
      %s309 = scalar_lea.vmem %s5, %s308
      // Predicated region
      $region37: #{sparse_residual_units.11} parent=35 // pred_check
        %p310 = pneg %p142
      $region38: #{sparse_residual_units.11} parent=35 // pred_check_branch
        %312 = sbr.rel (%p310) target = $region40
      $region39: #{sparse_residual_units.11} parent=35 // pred_region
        %s313 = smul.u32 2, %s22
      $region40: #{sparse_residual_units.11} parent=35 // pred_fallthru
        _
    $region36: #{sparse_residual_units.11} parent=5 // pred_fallthru
      _
    %p314 = scmp.le.s32.totalorder 2, %s17
    // Predicated region
    $region41: #{sparse_residual_units.11} parent=5 // pred_check
      %p315 = pneg %p314
    $region42: #{sparse_residual_units.11} parent=5 // pred_check_branch
      %317 = sbr.rel (%p315) target = $region44
    $region43: #{sparse_residual_units.11} parent=5 // pred_region
      %s318 = ssub.s32 %s17, 2
      // Predicated region
      $region45: #{sparse_residual_units.11} parent=43 // pred_check
        %p319 = pneg %p148
      $region46: #{sparse_residual_units.11} parent=43 // pred_check_branch
        %321 = sbr.rel (%p319) target = $region48
      $region47: #{sparse_residual_units.11} parent=43 // pred_region
        %s322 = smul.u32 2, %s23
        %p323 = scmp.lt.s32.totalorder %s322, 3
        %s324 = scalar_select %p323, %s322, 3
        %s325 = smul.addr %s324, 8
        %s326 = scalar_lea.vmem %s5, %s325
      $region48: #{sparse_residual_units.11} parent=43 // pred_fallthru
        _
    $region44: #{sparse_residual_units.11} parent=5 // pred_fallthru
      _
  $region6: #{sparse_residual_units.11} parent=0 // loop_footer
    %s21 = sadd.s32 1, %s17
  $region7: #{sparse_residual_units.11} parent=0 // loop_footer_branch
    %16 = sbr.rel target = $region3
  $region8: #{sparse_residual_units.11} parent=0 // loop_exit
    _

// kernel: sparse_residual_units.8
$region0: #{sparse_residual_units.8}
  #allocation0 [shape = 'u32[]', space=smem, size = 0x4, offset = 0x4, fixed_abs, tag = 'smem constant byte address 0x4 - core index']
  #allocation1 [shape = 'u32[144,128]{1,0:T(1,128)}', space=vmem, size = 0x12000, scoped, tag = 'internal scratch']
  #allocation2 [shape = 's32[1]{0}', space=sflag, size = 0x4, scoped, tag = 'scoped memory for sparse_residual_units.8']
  #allocation3 [shape = 'u8[512]{0}', space=smem, size = 0x200, scoped, tag = 'prefetched SMEM operand 0']
  %s0 = inlined_call_operand.vmem [shape: s32[2], index: 0, kind: input, shape index: {}]
  %s1 = inlined_call_operand.vmem [shape: bf16[32,128], index: 1, kind: input, shape index: {}]
  %s2 = inlined_call_operand.vmem [shape: f32[1,128], index: 2, kind: input, shape index: {}]
  %s3 = inlined_call_operand.vmem [shape: f32[1,128], index: 3, kind: input, shape index: {}]
  %s4 = inlined_call_operand.vmem [shape: f32[32,128], index: 4, kind: input, shape index: {}]
  %s5 = inlined_call_operand.vmem [shape: bf16[128,128], index: 5, kind: input, shape index: {}]
  %s6 = inlined_call_operand.vmem [shape: f32[1,128], index: 6, kind: input, shape index: {}]
  %s7 = inlined_call_operand.vmem [shape: f32[32,128], index: 7, kind: output, shape index: {}]
  %s8 = sld [smem:[#allocation0]]
  $region57: #{sparse_residual_units.8} parent=0
    _
  %s10 = ssub.s32 1, %s8
  %s11 = scalar_select 0, %s10, %s8
  %s12 = sshll.u32 %s0, 4
  %s13 = int_to_ptr.vmem [resolvable:$true] %s12
  %15 = dma.vmem_to_smem %s13, 16, [#allocation3], [#allocation2]
  %16 = dma.done [#allocation2], 16
  %17 = sfence
  loop: start=0, step=1, limit=4
  $region2: #{sparse_residual_units.8} parent=0 // loop_pre_header
    _
  $region3: #{sparse_residual_units.8} parent=0 // loop_header
    %s19 = sphi 0, %s23
    %p20 = scmp.ge.s32.totalorder %s19, 4
    %s37 = sphi 0, %s39
    %s40 = sphi 0, %s37
    %s41 = sphi 0, %s40
    %s57 = sphi 0, %s41
    %s61 = sphi 0, %s61
    %s63 = sphi 0, %s61
    %s64 = sphi 0, %s63
    %s78 = sphi 0, %s64
    %s82 = sphi 0, %s82
    %s84 = sphi 0, %s82
    %s85 = sphi 0, %s84
    %s99 = sphi 0, %s85
    %s105 = sphi 0, %s107
    %s108 = sphi 0, %s105
    %s109 = sphi 0, %s108
    %s125 = sphi 0, %s109
    %s129 = sphi 0, %s129
    %s131 = sphi 0, %s129
    %s132 = sphi 0, %s131
    %s146 = sphi 0, %s132
    %s150 = sphi 0, %s150
    %s152 = sphi 0, %s150
    %s153 = sphi 0, %s152
    %s167 = sphi 0, %s153
    %s173 = sphi 0, %s175
    %s176 = sphi 0, %s173
    %s177 = sphi 0, %s176
    %s193 = sphi 0, %s177
  $region4: #{sparse_residual_units.8} parent=0 // loop_header_branch
    %22 = sbr.rel (%p20) target = $region8
  $region5: #{sparse_residual_units.8} parent=0 // loop_body
    %s24 = ssub.s32 %s19, 1
    %s25 = ssub.s32 %s19, 2
    %s26 = sadd.s32 %s19, 1
    %s27 = sld [smem:[#allocation3]]
    %s28 = ssub.s32 %s27, 1
    %p29 = scmp.lt.s32.totalorder %s19, %s28
    %s30 = scalar_select %p29, %s19, %s28
    %s31 = sld [smem:[#allocation3]]
    %s32 = ssub.s32 %s31, 1
    %p33 = scmp.lt.s32.totalorder %s26, %s32
    %s34 = scalar_select %p33, %s26, %s32
    %s35 = ssub.s32 %s30, %s34
    %p36 = scmp.eq.s32.totalorder %s35, 0
    %s38 = sadd.s32 %s37, 1
    %s39 = scalar_select %p36, %s37, %s38
    %p42 = pneg %p36
    %p43 = scmp.eq.s32.totalorder %s19, 1
    %p44 = por %p42, %p43
    %p45 = scmp.ne.s32.totalorder %s37, %s40
    %p46 = scmp.eq.s32.totalorder %s19, 0
    %p47 = por %p45, %p46
    %p48 = scmp.ne.s32.totalorder %s37, %s40
    %p49 = scmp.eq.s32.totalorder %s24, 1
    %p50 = por %p48, %p49
    %p51 = scmp.ne.s32.totalorder %s40, %s41
    %p52 = scmp.eq.s32.totalorder %s24, 0
    %p53 = por %p51, %p52
    %p54 = scmp.ne.s32.totalorder %s40, %s41
    %p55 = scmp.eq.s32.totalorder %s25, 1
    %p56 = por %p54, %p55
    %p58 = scmp.ne.s32.totalorder %s41, %s57
    %p59 = scmp.eq.s32.totalorder %s25, 0
    %p60 = por %p58, %p59
    %s62 = sadd.s32 %s61, 1
    %p65 = scmp.eq.s32.totalorder %s19, 1
    %p66 = scmp.ne.s32.totalorder %s61, %s63
    %p67 = scmp.eq.s32.totalorder %s19, 0
    %p68 = por %p66, %p67
    %p69 = scmp.ne.s32.totalorder %s61, %s63
    %p70 = scmp.eq.s32.totalorder %s24, 1
    %p71 = por %p69, %p70
    %p72 = scmp.ne.s32.totalorder %s63, %s64
    %p73 = scmp.eq.s32.totalorder %s24, 0
    %p74 = por %p72, %p73
    %p75 = scmp.ne.s32.totalorder %s63, %s64
    %p76 = scmp.eq.s32.totalorder %s25, 1
    %p77 = por %p75, %p76
    %p79 = scmp.ne.s32.totalorder %s64, %s78
    %p80 = scmp.eq.s32.totalorder %s25, 0
    %p81 = por %p79, %p80
    %s83 = sadd.s32 %s82, 1
    %p86 = scmp.eq.s32.totalorder %s19, 1
    %p87 = scmp.ne.s32.totalorder %s82, %s84
    %p88 = scmp.eq.s32.totalorder %s19, 0
    %p89 = por %p87, %p88
    %p90 = scmp.ne.s32.totalorder %s82, %s84
    %p91 = scmp.eq.s32.totalorder %s24, 1
    %p92 = por %p90, %p91
    %p93 = scmp.ne.s32.totalorder %s84, %s85
    %p94 = scmp.eq.s32.totalorder %s24, 0
    %p95 = por %p93, %p94
    %p96 = scmp.ne.s32.totalorder %s84, %s85
    %p97 = scmp.eq.s32.totalorder %s25, 1
    %p98 = por %p96, %p97
    %p100 = scmp.ne.s32.totalorder %s85, %s99
    %p101 = scmp.eq.s32.totalorder %s25, 0
    %p102 = por %p100, %p101
    %s103 = ssub.s32 %s19, %s26
    %p104 = scmp.eq.s32.totalorder %s103, 0
    %s106 = sadd.s32 %s105, 1
    %s107 = scalar_select %p104, %s105, %s106
    %p110 = pneg %p104
    %p111 = scmp.eq.s32.totalorder %s19, 1
    %p112 = por %p110, %p111
    %p113 = scmp.ne.s32.totalorder %s105, %s108
    %p114 = scmp.eq.s32.totalorder %s19, 0
    %p115 = por %p113, %p114
    %p116 = scmp.ne.s32.totalorder %s105, %s108
    %p117 = scmp.eq.s32.totalorder %s24, 1
    %p118 = por %p116, %p117
    %p119 = scmp.ne.s32.totalorder %s108, %s109
    %p120 = scmp.eq.s32.totalorder %s24, 0
    %p121 = por %p119, %p120
    %p122 = scmp.ne.s32.totalorder %s108, %s109
    %p123 = scmp.eq.s32.totalorder %s25, 1
    %p124 = por %p122, %p123
    %p126 = scmp.ne.s32.totalorder %s109, %s125
    %p127 = scmp.eq.s32.totalorder %s25, 0
    %p128 = por %p126, %p127
    %s130 = sadd.s32 %s129, 1
    %p133 = scmp.eq.s32.totalorder %s19, 1
    %p134 = scmp.ne.s32.totalorder %s129, %s131
    %p135 = scmp.eq.s32.totalorder %s19, 0
    %p136 = por %p134, %p135
    %p137 = scmp.ne.s32.totalorder %s129, %s131
    %p138 = scmp.eq.s32.totalorder %s24, 1
    %p139 = por %p137, %p138
    %p140 = scmp.ne.s32.totalorder %s131, %s132
    %p141 = scmp.eq.s32.totalorder %s24, 0
    %p142 = por %p140, %p141
    %p143 = scmp.ne.s32.totalorder %s131, %s132
    %p144 = scmp.eq.s32.totalorder %s25, 1
    %p145 = por %p143, %p144
    %p147 = scmp.ne.s32.totalorder %s132, %s146
    %p148 = scmp.eq.s32.totalorder %s25, 0
    %p149 = por %p147, %p148
    %s151 = sadd.s32 %s150, 1
    %p154 = scmp.eq.s32.totalorder %s19, 1
    %p155 = scmp.ne.s32.totalorder %s150, %s152
    %p156 = scmp.eq.s32.totalorder %s19, 0
    %p157 = por %p155, %p156
    %p158 = scmp.ne.s32.totalorder %s150, %s152
    %p159 = scmp.eq.s32.totalorder %s24, 1
    %p160 = por %p158, %p159
    %p161 = scmp.ne.s32.totalorder %s152, %s153
    %p162 = scmp.eq.s32.totalorder %s24, 0
    %p163 = por %p161, %p162
    %p164 = scmp.ne.s32.totalorder %s152, %s153
    %p165 = scmp.eq.s32.totalorder %s25, 1
    %p166 = por %p164, %p165
    %p168 = scmp.ne.s32.totalorder %s153, %s167
    %p169 = scmp.eq.s32.totalorder %s25, 0
    %p170 = por %p168, %p169
    %s171 = ssub.s32 %s19, %s26
    %p172 = scmp.eq.s32.totalorder %s171, 0
    %s174 = sadd.s32 %s173, 1
    %s175 = scalar_select %p172, %s173, %s174
    %p178 = pneg %p172
    %p179 = scmp.eq.s32.totalorder %s19, 1
    %p180 = por %p178, %p179
    %p181 = scmp.ne.s32.totalorder %s173, %s176
    %p182 = scmp.eq.s32.totalorder %s19, 0
    %p183 = por %p181, %p182
    %p184 = scmp.ne.s32.totalorder %s173, %s176
    %p185 = scmp.eq.s32.totalorder %s24, 1
    %p186 = por %p184, %p185
    %p187 = scmp.ne.s32.totalorder %s176, %s177
    %p188 = scmp.eq.s32.totalorder %s24, 0
    %p189 = por %p187, %p188
    %p190 = scmp.ne.s32.totalorder %s176, %s177
    %p191 = scmp.eq.s32.totalorder %s25, 1
    %p192 = por %p190, %p191
    %p194 = scmp.ne.s32.totalorder %s177, %s193
    %p195 = scmp.eq.s32.totalorder %s25, 0
    %p196 = por %p194, %p195
    %p197 = scmp.le.s32.totalorder 1, %s19
    %p198 = scmp.lt.s32.totalorder %s19, 3
    %p199 = pnand %p197, %p198
    %p200 = pneg %p199
    // Predicated region
    $region9: #{sparse_residual_units.8} parent=5 // pred_check
      _
    $region10: #{sparse_residual_units.8} parent=5 // pred_check_branch
      %202 = sbr.rel (%p199) target = $region12
    $region11: #{sparse_residual_units.8} parent=5 // pred_region
      %s203 = ssub.s32 %s19, 1
      // Predicated region
      $region13: #{sparse_residual_units.8} parent=11 // pred_check
        %p204 = pneg %p74
      $region14: #{sparse_residual_units.8} parent=11 // pred_check_branch
        %206 = sbr.rel (%p204) target = $region16
      $region15: #{sparse_residual_units.8} parent=11 // pred_region
        _
      $region16: #{sparse_residual_units.8} parent=11 // pred_fallthru
        _
      // Predicated region
      $region17: #{sparse_residual_units.8} parent=11 // pred_check
        %p207 = pneg %p95
      $region18: #{sparse_residual_units.8} parent=11 // pred_check_branch
        %209 = sbr.rel (%p207) target = $region20
      $region19: #{sparse_residual_units.8} parent=11 // pred_region
        _
      $region20: #{sparse_residual_units.8} parent=11 // pred_fallthru
        _
      // Predicated region
      $region21: #{sparse_residual_units.8} parent=11 // pred_check
        %p210 = pneg %p142
      $region22: #{sparse_residual_units.8} parent=11 // pred_check_branch
        %212 = sbr.rel (%p210) target = $region24
      $region23: #{sparse_residual_units.8} parent=11 // pred_region
        _
      $region24: #{sparse_residual_units.8} parent=11 // pred_fallthru
        _
      // Predicated region
      $region25: #{sparse_residual_units.8} parent=11 // pred_check
        %p213 = pneg %p163
      $region26: #{sparse_residual_units.8} parent=11 // pred_check_branch
        %215 = sbr.rel (%p213) target = $region28
      $region27: #{sparse_residual_units.8} parent=11 // pred_region
        _
      $region28: #{sparse_residual_units.8} parent=11 // pred_fallthru
        _
    $region12: #{sparse_residual_units.8} parent=5 // pred_fallthru
      _
    %p216 = scmp.lt.s32.totalorder %s19, 2
    // Predicated region
    $region29: #{sparse_residual_units.8} parent=5 // pred_check
      %p217 = pneg %p216
    $region30: #{sparse_residual_units.8} parent=5 // pred_check_branch
      %219 = sbr.rel (%p217) target = $region32
    $region31: #{sparse_residual_units.8} parent=5 // pred_region
      // Predicated region
      $region33: #{sparse_residual_units.8} parent=31 // pred_check
        %p220 = pneg %p47
      $region34: #{sparse_residual_units.8} parent=31 // pred_check_branch
        %222 = sbr.rel (%p220) target = $region36
      $region35: #{sparse_residual_units.8} parent=31 // pred_region
        %s223 = sld [smem:[#allocation3]]
        %s224 = ssub.s32 %s223, 1
        %p225 = scmp.lt.s32.totalorder %s19, %s224
        %s226 = scalar_select %p225, %s19, %s224
        %s227 = smul.u32 2, %s226
        %p228 = scmp.lt.s32.totalorder %s227, 3
        %s229 = scalar_select %p228, %s227, 3
        %s230 = smul.addr %s229, 4
        %s231 = scalar_lea.vmem %s1, %s230
        %s232 = sld [smem:[#allocation3]]
        %s233 = ssub.s32 %s232, 1
        %p234 = scmp.lt.s32.totalorder %s19, %s233
        %s235 = scalar_select %p234, %s19, %s233
        %s236 = smul.u32 2, %s235
      $region36: #{sparse_residual_units.8} parent=31 // pred_fallthru
        _
      // Predicated region
      $region37: #{sparse_residual_units.8} parent=31 // pred_check
        %p237 = pneg %p115
      $region38: #{sparse_residual_units.8} parent=31 // pred_check_branch
        %239 = sbr.rel (%p237) target = $region40
      $region39: #{sparse_residual_units.8} parent=31 // pred_region
        %s240 = smul.u32 2, %s19
        %p241 = scmp.lt.s32.totalorder %s240, 3
        %s242 = scalar_select %p241, %s240, 3
        %s243 = smul.addr %s242, 8
        %s244 = scalar_lea.vmem %s4, %s243
        %s245 = smul.u32 2, %s19
      $region40: #{sparse_residual_units.8} parent=31 // pred_fallthru
        _
    $region32: #{sparse_residual_units.8} parent=5 // pred_fallthru
      _
    %p246 = scmp.le.s32.totalorder 1, %s19
    %p247 = scmp.lt.s32.totalorder %s19, 3
    %p248 = pnand %p246, %p247
    %p249 = pneg %p248
    // Predicated region
    $region41: #{sparse_residual_units.8} parent=5 // pred_check
      _
    $region42: #{sparse_residual_units.8} parent=5 // pred_check_branch
      %251 = sbr.rel (%p248) target = $region44
    $region43: #{sparse_residual_units.8} parent=5 // pred_region
      %s252 = ssub.s32 %s19, 1
      %s253 = sld [smem:[#allocation3]]
      %s254 = ssub.s32 %s253, 1
      %p255 = scmp.lt.s32.totalorder %s24, %s254
      %s256 = scalar_select %p255, %s24, %s254
      %s257 = smul.u32 2, %s256
      %p258 = scmp.lt.s32.totalorder %s257, 3
      %s259 = scalar_select %p258, %s257, 3
      %s260 = smul.addr %s259, 4
      %s261 = scalar_lea.vmem %s1, %s260
      %p262 = pneg %p53
      %p263 = pneg %p50
      %p264 = pneg %p74
      %p265 = pneg %p71
      %p266 = pneg %p95
      %p267 = pneg %p92
      %s268 = smul.u32 2, %s24
      %p269 = scmp.lt.s32.totalorder %s268, 3
      %s270 = scalar_select %p269, %s268, 3
      %s271 = smul.addr %s270, 8
      %s272 = scalar_lea.vmem %s4, %s271
      %p273 = pneg %p121
      %p274 = pneg %p118
      %p275 = pneg %p142
      %p276 = pneg %p139
      %p277 = pneg %p163
      %p278 = pneg %p160
      %p279 = pneg %p189
      %p280 = pneg %p186
      %s281 = smul.u32 2, %s24
      %p282 = scmp.lt.s32.totalorder %s281, 3
      %s283 = scalar_select %p282, %s281, 3
      %s284 = smul.addr %s283, 8
      %s285 = scalar_lea.vmem %s7, %s284
      %s286 = sld [smem:[#allocation3]]
      %s287 = ssub.s32 %s286, 1
      %p288 = scmp.lt.s32.totalorder %s24, %s287
      %s289 = scalar_select %p288, %s24, %s287
      %s290 = smul.u32 2, %s289
      %p291 = scmp.lt.s32.totalorder %s290, 3
      %s292 = scalar_select %p291, %s290, 3
      %s293 = smul.addr %s292, 4
      %s294 = scalar_lea.vmem %s1, %s293
      %s295 = sld [smem:[#allocation3]]
      %s296 = ssub.s32 %s295, 1
      %p297 = scmp.lt.s32.totalorder %s24, %s296
      %s298 = scalar_select %p297, %s24, %s296
      %s299 = smul.u32 2, %s298
      %s300 = smul.u32 2, %s24
      %p301 = scmp.lt.s32.totalorder %s300, 3
      %s302 = scalar_select %p301, %s300, 3
      %s303 = smul.addr %s302, 8
      %s304 = scalar_lea.vmem %s4, %s303
      %s305 = smul.u32 2, %s24
      %s306 = smul.u32 2, %s24
      %p307 = scmp.lt.s32.totalorder %s306, 3
      %s308 = scalar_select %p307, %s306, 3
      %s309 = smul.addr %s308, 8
      %s310 = scalar_lea.vmem %s7, %s309
      %s311 = smul.u32 2, %s24
      %s313 = smul.u32 %s24, 16
      %v314 = vlaneseq
      %v315 = vshrl.u32 %v314, 7
      %v316 = vadd.s32 %v315, 8
      %v317 = vstv %s313
      %v318 = vadd.s32 %v317, %v315
      %v319 = vadd.s32 %v317, %v316
      %s320 = sld [smem:[#allocation3 + $0x1]]
      %v321 = vstv %s320
      %vm322 = vcmp.lt.s32.totalorder %v318, %v321
      %vm323 = vcmp.lt.s32.totalorder %v319, %v321
      %v324 = vsel %vm322, 1, 0
      %v325 = vsel %vm323, 1, 0
      %v326 = vcvt.s32.f32 %v324
      %v327 = vcvt.s32.f32 %v325
      %v328 = vld [vmem:[%s294] sm:$0xf]
      %v329 = vld [vmem:[%s294 + $0x4] sm:$0xf]
      %v330 = vld [vmem:[%s2] sm:$0x1]
      %v331 = vunpack.c.l.bf16 %v328
      %v332 = vunpack.c.l.bf16 %v329
      %v334 = vlaneseq
      %v335 = vshrl.u32 %v334, 7
      %v336 = vsub.s32 0, %v335
      %v337 = vrot.slane %v330, %v336
      %v339 = vmul.f32 %v331, %v337
      %v340 = vmul.f32 %v332, %v337
      %v341 = vld [vmem:[%s3] sm:$0x1]
      %v343 = vlaneseq
      %v344 = vshrl.u32 %v343, 7
      %v345 = vsub.s32 0, %v344
      %v346 = vrot.slane %v341, %v345
      %v348 = vadd.f32 %v339, %v346
      %v349 = vadd.f32 %v340, %v346
      %v350 = vmax.f32 %v348, 0.0
      %v351 = vmax.f32 %v349, 0.0
      %v352 = vld [vmem:[%s304] sm:$0xff]
      %v353 = vld [vmem:[%s304 + $0x8] sm:$0xff]
      %v354 = vpack.c.bf16 %v353, %v352
      %v355 = vld [vmem:[%s5] sm:$0xf]
      %v356 = vld [vmem:[%s5 + $0x4] sm:$0xf]
      %v357 = vld [vmem:[%s5 + $0x8] sm:$0xf]
      %v358 = vld [vmem:[%s5 + $0xc] sm:$0xf]
      %v359 = vld [vmem:[%s5 + $0x10] sm:$0xf]
      %v360 = vld [vmem:[%s5 + $0x14] sm:$0xf]
      %v361 = vld [vmem:[%s5 + $0x18] sm:$0xf]
      %v362 = vld [vmem:[%s5 + $0x1c] sm:$0xf]
      %v363 = vld [vmem:[%s5 + $0x20] sm:$0xf]
      %v364 = vld [vmem:[%s5 + $0x24] sm:$0xf]
      %v365 = vld [vmem:[%s5 + $0x28] sm:$0xf]
      %v366 = vld [vmem:[%s5 + $0x2c] sm:$0xf]
      %v367 = vld [vmem:[%s5 + $0x30] sm:$0xf]
      %v368 = vld [vmem:[%s5 + $0x34] sm:$0xf]
      %v369 = vld [vmem:[%s5 + $0x38] sm:$0xf]
      %v370 = vld [vmem:[%s5 + $0x3c] sm:$0xf]
      %v371 = vld [vmem:[%s6] sm:$0x1]
      %v373 = vlaneseq
      %v374 = vshrl.u32 %v373, 7
      %v375 = vsub.s32 0, %v374
      %v376 = vrot.slane %v371, %v375
      %v394 = vunpack.c.l.b16 %v355
      %v395 = vunpack.c.l.b16 %v356
      %v396 = vunpack.c.l.b16 %v357
      %v397 = vunpack.c.l.b16 %v358
      %v398 = vunpack.c.l.b16 %v359
      %v399 = vunpack.c.l.b16 %v360
      %v400 = vunpack.c.l.b16 %v361
      %v401 = vunpack.c.l.b16 %v362
      %v402 = vunpack.c.l.b16 %v363
      %v403 = vunpack.c.l.b16 %v364
      %v404 = vunpack.c.l.b16 %v365
      %v405 = vunpack.c.l.b16 %v366
      %v406 = vunpack.c.l.b16 %v367
      %v407 = vunpack.c.l.b16 %v368
      %v408 = vunpack.c.l.b16 %v369
      %v409 = vunpack.c.l.b16 %v370
      %v410 = vpack.c.b16 %v395, %v394
      %v411 = vpack.c.b16 %v397, %v396
      %v412 = vpack.c.b16 %v399, %v398
      %v413 = vpack.c.b16 %v401, %v400
      %v414 = vpack.c.b16 %v403, %v402
      %v415 = vpack.c.b16 %v405, %v404
      %v416 = vpack.c.b16 %v407, %v406
      %v417 = vpack.c.b16 %v409, %v408
      %426 = vmatprep.subr.bf16.mxu0 0
      %427 = vmatpush1.bf16.msra.mxu0 %v410
      %428 = vmatprep.subr.bf16.mxu0 0
      %429 = vmatpush1.bf16.msra.mxu0 %v411
      %430 = vmatprep.subr.bf16.mxu0 0
      %431 = vmatpush1.bf16.msra.mxu0 %v412
      %432 = vmatprep.subr.bf16.mxu0 0
      %433 = vmatpush1.bf16.msra.mxu0 %v413
      %434 = vmatprep.subr.bf16.mxu0 0
      %435 = vmatpush1.bf16.msra.mxu0 %v414
      %436 = vmatprep.subr.bf16.mxu0 0
      %437 = vmatpush1.bf16.msra.mxu0 %v415
      %438 = vmatprep.subr.bf16.mxu0 0
      %439 = vmatpush1.bf16.msra.mxu0 %v416
      %440 = vmatprep.subr.bf16.mxu0 0
      %441 = vmatpush1.bf16.msra.mxu0 %v417
      %442 = vmatprep.subr.bf16.mxu0 0
      %443 = vmatpush1.bf16.msra.mxu0 0
      %444 = vmatprep.subr.bf16.mxu0 0
      %445 = vmatpush1.bf16.msra.mxu0 0
      %446 = vmatprep.subr.bf16.mxu0 0
      %447 = vmatpush1.bf16.msra.mxu0 0
      %448 = vmatprep.subr.bf16.mxu0 0
      %449 = vmatpush1.bf16.msra.mxu0 0
      %450 = vmatprep.subr.bf16.mxu0 0
      %451 = vmatpush1.bf16.msra.mxu0 0
      %452 = vmatprep.subr.bf16.mxu0 0
      %453 = vmatpush1.bf16.msra.mxu0 0
      %454 = vmatprep.subr.bf16.mxu0 0
      %455 = vmatpush1.bf16.msra.mxu0 0
      %456 = vmatprep.subr.bf16.mxu0 0
      %457 = vmatpush1.bf16.msra.mxu0 0
      %458 = vmatprep.mubr.bf16.mxu0 0
      %459 = vmatmul.mubr.bf16.gmra.mrb[0].mxu0 %v354
      %v460 = vpop.f32.mrb[0].mxu0
      %v461 = vadd.f32 %v376, %v460
      %v462 = vpop.f32.mrb[0].mxu0
      %v463 = vpop.f32.mrb[0].mxu0
      %v464 = vadd.f32 %v376, %v463
      %v465 = vpop.f32.mrb[0].mxu0
      %466 = vdwg.mxu0
      %v467 = vmul.f32 %v326, %v350
      %v468 = vmul.f32 %v327, %v351
      %v469 = vadd.f32 %v461, %v467
      %v470 = vadd.f32 %v464, %v468
      %471 = vst [vmem:[%s310] sm:$0xff] %v469
      %472 = vst [vmem:[%s310 + $0x8] sm:$0xff] %v470
      %s473 = smul.u32 2, %s24
      %p474 = scmp.lt.s32.totalorder %s473, 3
      %s475 = scalar_select %p474, %s473, 3
      %s476 = smul.addr %s475, 8
      %s477 = scalar_lea.vmem %s7, %s476
      // Predicated region
      $region45: #{sparse_residual_units.8} parent=43 // pred_check
        %p478 = pneg %p186
      $region46: #{sparse_residual_units.8} parent=43 // pred_check_branch
        %480 = sbr.rel (%p478) target = $region48
      $region47: #{sparse_residual_units.8} parent=43 // pred_region
        %s481 = smul.u32 2, %s24
      $region48: #{sparse_residual_units.8} parent=43 // pred_fallthru
        _
    $region44: #{sparse_residual_units.8} parent=5 // pred_fallthru
      _
    %p482 = scmp.le.s32.totalorder 2, %s19
    // Predicated region
    $region49: #{sparse_residual_units.8} parent=5 // pred_check
      %p483 = pneg %p482
    $region50: #{sparse_residual_units.8} parent=5 // pred_check_branch
      %485 = sbr.rel (%p483) target = $region52
    $region51: #{sparse_residual_units.8} parent=5 // pred_region
      %s486 = ssub.s32 %s19, 2
      // Predicated region
      $region53: #{sparse_residual_units.8} parent=51 // pred_check
        %p487 = pneg %p192
      $region54: #{sparse_residual_units.8} parent=51 // pred_check_branch
        %489 = sbr.rel (%p487) target = $region56
      $region55: #{sparse_residual_units.8} parent=51 // pred_region
        %s490 = smul.u32 2, %s25
        %p491 = scmp.lt.s32.totalorder %s490, 3
        %s492 = scalar_select %p491, %s490, 3
        %s493 = smul.addr %s492, 8
        %s494 = scalar_lea.vmem %s7, %s493
      $region56: #{sparse_residual_units.8} parent=51 // pred_fallthru
        _
    $region52: #{sparse_residual_units.8} parent=5 // pred_fallthru
      _
  $region6: #{sparse_residual_units.8} parent=0 // loop_footer
    %s23 = sadd.s32 1, %s19
  $region7: #{sparse_residual_units.8} parent=0 // loop_footer_branch
    %18 = sbr.rel target = $region3
  $region8: #{sparse_residual_units.8} parent=0 // loop_exit
    _

</llo_original>
